<compile_context>
chip_gen: v7x
topology: tpu7x:2x2x1
jax: 0.10.0
libtpu: 0.0.40
codegen_flags: <defaults>
</compile_context>

<pallas_src>
import numpy as np
import jax
import jax.numpy as jnp
from jax.experimental import pallas as pl
from jax.experimental.pallas import tpu as pltpu


# ----------------------------------------------------------------------------
# Parameter setup (glue, plain numpy/JAX): Fixed_Prior background + weights.
# ----------------------------------------------------------------------------
def fixed_prior_background(N=256, a=3.0 / 3.8 ** 2):
    """Fixed_Prior().fixed_background() == P @ sqrt(D_inv), shape (N,)."""
    J = np.zeros((N, N), dtype=np.float64)
    i = np.arange(N - 1)
    J[i, i] += a
    J[i + 1, i + 1] += a
    J[i, i + 1] = -a
    J[i + 1, i] = -a
    D, P = np.linalg.eigh(J)
    with np.errstate(divide="ignore"):
        D_inv = 1.0 / D
    D_inv[0] = 0.0
    bg = P @ np.sqrt(D_inv)
    return bg.astype(np.float32)


def init_params(key, hidden_features, output_dim=256):
    # Deterministic synthetic init (shapes match the nn.Module __init__).
    C, N = hidden_features, output_dim
    ks = jax.random.split(key, 9)

    def lin(kw, kb, fan_in, shape_w, shape_b):
        bound = 1.0 / np.sqrt(fan_in)
        w = jax.random.uniform(kw, shape_w, jnp.float32, -bound, bound)
        b = jax.random.uniform(kb, shape_b, jnp.float32, -bound, bound)
        return w, b

    wq, bq = lin(ks[0], ks[1], 1, (1, C), (1, C))     # nn.Linear(1, C)
    wk, bk = lin(ks[2], ks[3], 1, (1, C), (1, C))
    wv, bv = lin(ks[4], ks[5], 1, (1, C), (1, C))
    wo, bo = lin(ks[6], ks[7], C, (C, N), (1, N))     # nn.Linear(C, N), stored transposed

    # TODO(synk): torch's orthogonal parametrization map has no Pallas equivalent;
    # a deterministic orthogonal matrix of the right shape is built via host QR.
    A = np.asarray(jax.random.normal(ks[8], (N, N), jnp.float32), dtype=np.float64)
    Q, _ = np.linalg.qr(A)
    qt = jnp.asarray(Q.T, dtype=jnp.float32)          # pass Q transposed

    bg = jnp.asarray(fixed_prior_background(N)).reshape(1, N)
    return {"wq": wq, "bq": bq, "wk": wk, "bk": bk, "wv": wv, "bv": bv,
            "wo": wo, "bo": bo, "qt": qt, "bg": bg}


# ----------------------------------------------------------------------------
# Pallas kernel.  Working layout: sequence on sublanes, batch on the 128-lane
# axis; the only big tensors are the (N, TB) z^T build and the (TB, N) output.
# ----------------------------------------------------------------------------
def _harmonic_prior_kernel(coef_ref, x_ref, wvo_ref, cvec_ref, qt_ref, bg_ref,
                           out_ref):
    x = x_ref[...]                                    # (S, TB) f32, batch on lanes
    S = x.shape[0]

    c0 = coef_ref[0]                                  # scale * (wq . wk)
    c1 = coef_ref[1]                                  # scale * (bq . wk)

    # Per-batch statistics (cheap sublane reductions over the short seq axis).
    xmax = jnp.max(x, axis=0, keepdims=True)          # (1, TB)
    xmin = jnp.min(x, axis=0, keepdims=True)          # (1, TB)
    s2 = jnp.sum(x, axis=0, keepdims=True)            # (1, TB) = sum_i x[b, i]

    # s1[b] = sum_i x[b,i] * (softmax_j((c0*x[b,i]+c1)*x[b,j]) . x[b,:])
    # Statically unrolled over the (small) sequence axis; everything stays 2-D
    # and lane-dense (S on sublanes, batch on lanes).
    # TODO(synk): for long sequences switch this unrolled loop to lax.fori_loop
    # (or a blocked formulation) to bound code size.
    s1 = jnp.zeros_like(s2)
    for i in range(S):
        xi = x[i:i + 1, :]                            # (1, TB)
        a = c0 * xi + c1                              # (1, TB): logits row i = a * x[b,:]
        m = jnp.where(a >= 0.0, a * xmax, a * xmin)   # exact row max of the logits
        e = jnp.exp(a * x - m)                        # (S, TB)
        se = jnp.sum(e, axis=0, keepdims=True)        # (1, TB)
        sex = jnp.sum(e * x, axis=0, keepdims=True)   # (1, TB)
        s1 = s1 + xi * sex * pl.reciprocal(se, approx=True)

    # y = relu(x @ out_layer(attn(x))) == relu(s1*(wv@wo) + s2*(bv@wo + bo));
    # built transposed (N on sublanes, batch on lanes), z^T = sqrt(1 / y^T).
    zt = jax.lax.rsqrt(
        jnp.maximum(wvo_ref[...] * s1 + cvec_ref[...] * s2, 0.0))  # (N, TB)

    # One aligned f32 XLU transpose back to batch-on-sublanes, then a single
    # native-tile bf16 MXU matmul: out = z @ Q^T + background.
    z = jnp.transpose(zt).astype(jnp.bfloat16)        # (TB, N)
    out_ref[...] = (jnp.dot(z, qt_ref[...], preferred_element_type=jnp.float32)
                    + bg_ref[...])                    # (TB, N) f32, lane-dense stores

    # Reference sets h_inv[0] = 0 on the (B, N) tensor (first *batch* row), so
    # output row 0 equals the background exactly.  Only possible in grid step 0.
    @pl.when(pl.program_id(0) == 0)
    def _():
        out_ref[0:1, :] = bg_ref[...]


def _choose_block_b(B, block_b=1024):
    """Batch tile TB: a multiple of 128 (lane-dense), preferring a divisor of B
    (no padding / no output slice) and ~>= 2 grid steps so both v7x TensorCores
    get work; single-TC v5e/v6e are unaffected."""
    max_tb = max(128, (block_b // 128) * 128)
    half = ((B + 1) // 2 + 127) // 128 * 128           # ~B/2 rounded up to 128
    cap = max(128, min(max_tb, half))
    for tb in range(cap, 127, -128):                   # largest no-padding divisor first
        if B % tb == 0:
            return tb
    return cap


def harmonic_prior_forward(x, params, block_b=1024):
    """x: (B, S) -> (B, N) float32, matching HarmonicPrior.forward."""
    B, S = x.shape
    C = params["wq"].shape[1]
    N = params["qt"].shape[0]
    scale = float(C) ** -0.5
    x = x.astype(jnp.float32)

    # ---- host-side (XLA) exact algebraic folding of the tiny linear layers ----
    wq, bq, wk, bk = params["wq"], params["bq"], params["wk"], params["bk"]
    wv, bv, wo, bo = params["wv"], params["bv"], params["wo"], params["bo"]
    # logits[b,i,j] = (c0*x[b,i] + c1) * x[b,j]  (+ terms constant in j, dropped:
    # they cancel exactly in the softmax)
    coef = (scale * jnp.stack([jnp.sum(wq * wk),
                               jnp.sum(bq * wk)])).astype(jnp.float32)   # (2,) SMEM
    wvo_col = (wv @ wo).reshape(N, 1).astype(jnp.float32)       # (wv @ out_layer.W)^T
    cvec_col = (bv @ wo + bo).reshape(N, 1).astype(jnp.float32)  # (bv @ W + b)^T
    qt_bf16 = params["qt"].astype(jnp.bfloat16)                  # Q^T, bf16 for the MXU
    bg = params["bg"]                                            # (1, N) f32

    # ---- batch tiling: batch on the lane axis, TB a multiple of 128 ----
    tb = _choose_block_b(B, block_b)
    bp = pl.cdiv(B, tb) * tb
    xt = jnp.transpose(x)                                        # (S, B): batch on lanes
    if bp != B:                                                  # ragged tail only
        xt = jnp.pad(xt, ((0, 0), (0, bp - B)))

    out = pl.pallas_call(
        _harmonic_prior_kernel,
        out_shape=jax.ShapeDtypeStruct((bp, N), jnp.float32),
        grid_spec=pltpu.PrefetchScalarGridSpec(
            num_scalar_prefetch=0,
            grid=(bp // tb,),
            in_specs=[
                pl.BlockSpec(memory_space=pltpu.MemorySpace.SMEM),  # coef (2,)
                pl.BlockSpec((S, tb), lambda b: (0, b)),            # x^T  (S, TB)
                pl.BlockSpec((N, 1), lambda b: (0, 0)),             # (wv@wo)^T       (N, 1)
                pl.BlockSpec((N, 1), lambda b: (0, 0)),             # (bv@wo + bo)^T  (N, 1)
                pl.BlockSpec((N, N), lambda b: (0, 0)),             # Q^T (bf16)
                pl.BlockSpec((1, N), lambda b: (0, 0)),             # background
            ],
            out_specs=pl.BlockSpec((tb, N), lambda b: (b, 0)),      # dense (TB, N) stores
        ),
        compiler_params=pltpu.CompilerParams(
            dimension_semantics=("parallel",)),   # batch tiles across TCs (v7x megacore)
    )(coef, xt, wvo_col, cvec_col, qt_bf16, bg)
    return out if bp == B else out[:B]


if __name__ == "__main__":
    key = jax.random.PRNGKey(0)
    kx, kp = jax.random.split(key)

    B, S, C, N = 2, 16, 32, 256        # batch, seq, hidden_features, output_dim
    x = jax.random.normal(kx, (B, S), dtype=jnp.float32)
    params = init_params(kp, hidden_features=C, output_dim=N)

    out = harmonic_prior_forward(x, params)
    out = jax.block_until_ready(out)

    assert out.shape == (B, N), out.shape
    # Batch row 0 must equal the fixed background exactly (reference: h_inv[0] = 0).
    np.testing.assert_allclose(np.asarray(out[0]), np.asarray(params["bg"][0]),
                               rtol=1e-5, atol=1e-5)
    print("KERNEL_OK")
</pallas_src>

<mosaic_0001>
module attributes {stable_mosaic.version = 11 : i64} {
  func.func @_harmonic_prior_kernel(%arg0: i32, %arg1: memref<2xf32, #tpu.memory_space<smem>>, %arg2: memref<16x128xf32, #tpu.memory_space<vmem>>, %arg3: memref<256x1xf32, #tpu.memory_space<vmem>>, %arg4: memref<256x1xf32, #tpu.memory_space<vmem>>, %arg5: memref<256x256xbf16, #tpu.memory_space<vmem>>, %arg6: memref<1x256xf32, #tpu.memory_space<vmem>>, %arg7: memref<128x256xf32, #tpu.memory_space<vmem>>) attributes {dimension_semantics = [#tpu.dimension_semantics<parallel>], iteration_bounds = array<i64: 1>, scalar_prefetch = 0 : i64, scratch_operands = 0 : i64, tpu.core_type = #tpu.core_type<tc>, window_params = [{transform_indices = @transform_0, window_bounds = array<i64: 2>}, {transform_indices = @transform_1, window_bounds = array<i64: 16, 128>}, {pipeline_mode = #tpu.pipeline_mode<synchronous>, transform_indices = @transform_2, window_bounds = array<i64: 256, 1>}, {pipeline_mode = #tpu.pipeline_mode<synchronous>, transform_indices = @transform_3, window_bounds = array<i64: 256, 1>}, {pipeline_mode = #tpu.pipeline_mode<synchronous>, transform_indices = @transform_4, window_bounds = array<i64: 256, 256>}, {pipeline_mode = #tpu.pipeline_mode<synchronous>, transform_indices = @transform_5, window_bounds = array<i64: 1, 256>}, {transform_indices = @transform_6, window_bounds = array<i64: 128, 256>}]} {
    %c0 = arith.constant 0 : index
    %c0_0 = arith.constant 0 : index
    %0 = vector.load %arg2[%c0, %c0_0] : memref<16x128xf32, #tpu.memory_space<vmem>>, vector<16x128xf32>
    %c0_1 = arith.constant 0 : index
    %1 = memref.load %arg1[%c0_1] : memref<2xf32, #tpu.memory_space<smem>>
    %c1 = arith.constant 1 : index
    %2 = memref.load %arg1[%c1] : memref<2xf32, #tpu.memory_space<smem>>
    %cst = arith.constant dense<0xFF800000> : vector<128xf32>
    %3 = vector.multi_reduction <maximumf>, %0, %cst [0] : vector<16x128xf32> to vector<128xf32>
    %4 = vector.shape_cast %3 : vector<128xf32> to vector<1x128xf32>
    %cst_2 = arith.constant dense<0x7F800000> : vector<128xf32>
    %5 = vector.multi_reduction <minimumf>, %0, %cst_2 [0] : vector<16x128xf32> to vector<128xf32>
    %6 = vector.shape_cast %5 : vector<128xf32> to vector<1x128xf32>
    %cst_3 = arith.constant dense<0.000000e+00> : vector<128xf32>
    %7 = vector.multi_reduction <add>, %0, %cst_3 [0] : vector<16x128xf32> to vector<128xf32>
    %8 = vector.shape_cast %7 : vector<128xf32> to vector<1x128xf32>
    %cst_4 = arith.constant 0.000000e+00 : f32
    %9 = vector.broadcast %cst_4 : f32 to vector<1x128xf32>
    %10 = vector.extract_strided_slice %0 {offsets = [0, 0], sizes = [1, 128], strides = [1, 1]} : vector<16x128xf32> to vector<1x128xf32>
    %11 = vector.broadcast %1 : f32 to vector<1x128xf32>
    %12 = arith.mulf %11, %10 : vector<1x128xf32>
    %13 = vector.broadcast %2 : f32 to vector<1x128xf32>
    %14 = arith.addf %12, %13 : vector<1x128xf32>
    %cst_5 = arith.constant 0.000000e+00 : f32
    %15 = vector.broadcast %cst_5 : f32 to vector<1x128xf32>
    %16 = arith.cmpf oge, %14, %15 : vector<1x128xf32>
    %17 = arith.mulf %14, %4 : vector<1x128xf32>
    %18 = arith.mulf %14, %6 : vector<1x128xf32>
    %19 = arith.select %16, %17, %18 : vector<1x128xi1>, vector<1x128xf32>
    %20 = vector.broadcast %14 : vector<1x128xf32> to vector<16x128xf32>
    %21 = arith.mulf %20, %0 : vector<16x128xf32>
    %22 = vector.broadcast %19 : vector<1x128xf32> to vector<16x128xf32>
    %23 = arith.subf %21, %22 : vector<16x128xf32>
    %24 = math.exp %23 : vector<16x128xf32>
    %cst_6 = arith.constant dense<0.000000e+00> : vector<128xf32>
    %25 = vector.multi_reduction <add>, %24, %cst_6 [0] : vector<16x128xf32> to vector<128xf32>
    %26 = vector.shape_cast %25 : vector<128xf32> to vector<1x128xf32>
    %27 = arith.mulf %24, %0 : vector<16x128xf32>
    %cst_7 = arith.constant dense<0.000000e+00> : vector<128xf32>
    %28 = vector.multi_reduction <add>, %27, %cst_7 [0] : vector<16x128xf32> to vector<128xf32>
    %29 = vector.shape_cast %28 : vector<128xf32> to vector<1x128xf32>
    %30 = arith.mulf %10, %29 : vector<1x128xf32>
    %31 = tpu.reciprocal %26 {approx = true} : vector<1x128xf32> -> vector<1x128xf32>
    %32 = arith.mulf %30, %31 : vector<1x128xf32>
    %33 = arith.addf %9, %32 : vector<1x128xf32>
    %34 = vector.extract_strided_slice %0 {offsets = [1, 0], sizes = [1, 128], strides = [1, 1]} : vector<16x128xf32> to vector<1x128xf32>
    %35 = vector.broadcast %1 : f32 to vector<1x128xf32>
    %36 = arith.mulf %35, %34 : vector<1x128xf32>
    %37 = vector.broadcast %2 : f32 to vector<1x128xf32>
    %38 = arith.addf %36, %37 : vector<1x128xf32>
    %cst_8 = arith.constant 0.000000e+00 : f32
    %39 = vector.broadcast %cst_8 : f32 to vector<1x128xf32>
    %40 = arith.cmpf oge, %38, %39 : vector<1x128xf32>
    %41 = arith.mulf %38, %4 : vector<1x128xf32>
    %42 = arith.mulf %38, %6 : vector<1x128xf32>
    %43 = arith.select %40, %41, %42 : vector<1x128xi1>, vector<1x128xf32>
    %44 = vector.broadcast %38 : vector<1x128xf32> to vector<16x128xf32>
    %45 = arith.mulf %44, %0 : vector<16x128xf32>
    %46 = vector.broadcast %43 : vector<1x128xf32> to vector<16x128xf32>
    %47 = arith.subf %45, %46 : vector<16x128xf32>
    %48 = math.exp %47 : vector<16x128xf32>
    %cst_9 = arith.constant dense<0.000000e+00> : vector<128xf32>
    %49 = vector.multi_reduction <add>, %48, %cst_9 [0] : vector<16x128xf32> to vector<128xf32>
    %50 = vector.shape_cast %49 : vector<128xf32> to vector<1x128xf32>
    %51 = arith.mulf %48, %0 : vector<16x128xf32>
    %cst_10 = arith.constant dense<0.000000e+00> : vector<128xf32>
    %52 = vector.multi_reduction <add>, %51, %cst_10 [0] : vector<16x128xf32> to vector<128xf32>
    %53 = vector.shape_cast %52 : vector<128xf32> to vector<1x128xf32>
    %54 = arith.mulf %34, %53 : vector<1x128xf32>
    %55 = tpu.reciprocal %50 {approx = true} : vector<1x128xf32> -> vector<1x128xf32>
    %56 = arith.mulf %54, %55 : vector<1x128xf32>
    %57 = arith.addf %33, %56 : vector<1x128xf32>
    %58 = vector.extract_strided_slice %0 {offsets = [2, 0], sizes = [1, 128], strides = [1, 1]} : vector<16x128xf32> to vector<1x128xf32>
    %59 = vector.broadcast %1 : f32 to vector<1x128xf32>
    %60 = arith.mulf %59, %58 : vector<1x128xf32>
    %61 = vector.broadcast %2 : f32 to vector<1x128xf32>
    %62 = arith.addf %60, %61 : vector<1x128xf32>
    %cst_11 = arith.constant 0.000000e+00 : f32
    %63 = vector.broadcast %cst_11 : f32 to vector<1x128xf32>
    %64 = arith.cmpf oge, %62, %63 : vector<1x128xf32>
    %65 = arith.mulf %62, %4 : vector<1x128xf32>
    %66 = arith.mulf %62, %6 : vector<1x128xf32>
    %67 = arith.select %64, %65, %66 : vector<1x128xi1>, vector<1x128xf32>
    %68 = vector.broadcast %62 : vector<1x128xf32> to vector<16x128xf32>
    %69 = arith.mulf %68, %0 : vector<16x128xf32>
    %70 = vector.broadcast %67 : vector<1x128xf32> to vector<16x128xf32>
    %71 = arith.subf %69, %70 : vector<16x128xf32>
    %72 = math.exp %71 : vector<16x128xf32>
    %cst_12 = arith.constant dense<0.000000e+00> : vector<128xf32>
    %73 = vector.multi_reduction <add>, %72, %cst_12 [0] : vector<16x128xf32> to vector<128xf32>
    %74 = vector.shape_cast %73 : vector<128xf32> to vector<1x128xf32>
    %75 = arith.mulf %72, %0 : vector<16x128xf32>
    %cst_13 = arith.constant dense<0.000000e+00> : vector<128xf32>
    %76 = vector.multi_reduction <add>, %75, %cst_13 [0] : vector<16x128xf32> to vector<128xf32>
    %77 = vector.shape_cast %76 : vector<128xf32> to vector<1x128xf32>
    %78 = arith.mulf %58, %77 : vector<1x128xf32>
    %79 = tpu.reciprocal %74 {approx = true} : vector<1x128xf32> -> vector<1x128xf32>
    %80 = arith.mulf %78, %79 : vector<1x128xf32>
    %81 = arith.addf %57, %80 : vector<1x128xf32>
    %82 = vector.extract_strided_slice %0 {offsets = [3, 0], sizes = [1, 128], strides = [1, 1]} : vector<16x128xf32> to vector<1x128xf32>
    %83 = vector.broadcast %1 : f32 to vector<1x128xf32>
    %84 = arith.mulf %83, %82 : vector<1x128xf32>
    %85 = vector.broadcast %2 : f32 to vector<1x128xf32>
    %86 = arith.addf %84, %85 : vector<1x128xf32>
    %cst_14 = arith.constant 0.000000e+00 : f32
    %87 = vector.broadcast %cst_14 : f32 to vector<1x128xf32>
    %88 = arith.cmpf oge, %86, %87 : vector<1x128xf32>
    %89 = arith.mulf %86, %4 : vector<1x128xf32>
    %90 = arith.mulf %86, %6 : vector<1x128xf32>
    %91 = arith.select %88, %89, %90 : vector<1x128xi1>, vector<1x128xf32>
    %92 = vector.broadcast %86 : vector<1x128xf32> to vector<16x128xf32>
    %93 = arith.mulf %92, %0 : vector<16x128xf32>
    %94 = vector.broadcast %91 : vector<1x128xf32> to vector<16x128xf32>
    %95 = arith.subf %93, %94 : vector<16x128xf32>
    %96 = math.exp %95 : vector<16x128xf32>
    %cst_15 = arith.constant dense<0.000000e+00> : vector<128xf32>
    %97 = vector.multi_reduction <add>, %96, %cst_15 [0] : vector<16x128xf32> to vector<128xf32>
    %98 = vector.shape_cast %97 : vector<128xf32> to vector<1x128xf32>
    %99 = arith.mulf %96, %0 : vector<16x128xf32>
    %cst_16 = arith.constant dense<0.000000e+00> : vector<128xf32>
    %100 = vector.multi_reduction <add>, %99, %cst_16 [0] : vector<16x128xf32> to vector<128xf32>
    %101 = vector.shape_cast %100 : vector<128xf32> to vector<1x128xf32>
    %102 = arith.mulf %82, %101 : vector<1x128xf32>
    %103 = tpu.reciprocal %98 {approx = true} : vector<1x128xf32> -> vector<1x128xf32>
    %104 = arith.mulf %102, %103 : vector<1x128xf32>
    %105 = arith.addf %81, %104 : vector<1x128xf32>
    %106 = vector.extract_strided_slice %0 {offsets = [4, 0], sizes = [1, 128], strides = [1, 1]} : vector<16x128xf32> to vector<1x128xf32>
    %107 = vector.broadcast %1 : f32 to vector<1x128xf32>
    %108 = arith.mulf %107, %106 : vector<1x128xf32>
    %109 = vector.broadcast %2 : f32 to vector<1x128xf32>
    %110 = arith.addf %108, %109 : vector<1x128xf32>
    %cst_17 = arith.constant 0.000000e+00 : f32
    %111 = vector.broadcast %cst_17 : f32 to vector<1x128xf32>
    %112 = arith.cmpf oge, %110, %111 : vector<1x128xf32>
    %113 = arith.mulf %110, %4 : vector<1x128xf32>
    %114 = arith.mulf %110, %6 : vector<1x128xf32>
    %115 = arith.select %112, %113, %114 : vector<1x128xi1>, vector<1x128xf32>
    %116 = vector.broadcast %110 : vector<1x128xf32> to vector<16x128xf32>
    %117 = arith.mulf %116, %0 : vector<16x128xf32>
    %118 = vector.broadcast %115 : vector<1x128xf32> to vector<16x128xf32>
    %119 = arith.subf %117, %118 : vector<16x128xf32>
    %120 = math.exp %119 : vector<16x128xf32>
    %cst_18 = arith.constant dense<0.000000e+00> : vector<128xf32>
    %121 = vector.multi_reduction <add>, %120, %cst_18 [0] : vector<16x128xf32> to vector<128xf32>
    %122 = vector.shape_cast %121 : vector<128xf32> to vector<1x128xf32>
    %123 = arith.mulf %120, %0 : vector<16x128xf32>
    %cst_19 = arith.constant dense<0.000000e+00> : vector<128xf32>
    %124 = vector.multi_reduction <add>, %123, %cst_19 [0] : vector<16x128xf32> to vector<128xf32>
    %125 = vector.shape_cast %124 : vector<128xf32> to vector<1x128xf32>
    %126 = arith.mulf %106, %125 : vector<1x128xf32>
    %127 = tpu.reciprocal %122 {approx = true} : vector<1x128xf32> -> vector<1x128xf32>
    %128 = arith.mulf %126, %127 : vector<1x128xf32>
    %129 = arith.addf %105, %128 : vector<1x128xf32>
    %130 = vector.extract_strided_slice %0 {offsets = [5, 0], sizes = [1, 128], strides = [1, 1]} : vector<16x128xf32> to vector<1x128xf32>
    %131 = vector.broadcast %1 : f32 to vector<1x128xf32>
    %132 = arith.mulf %131, %130 : vector<1x128xf32>
    %133 = vector.broadcast %2 : f32 to vector<1x128xf32>
    %134 = arith.addf %132, %133 : vector<1x128xf32>
    %cst_20 = arith.constant 0.000000e+00 : f32
    %135 = vector.broadcast %cst_20 : f32 to vector<1x128xf32>
    %136 = arith.cmpf oge, %134, %135 : vector<1x128xf32>
    %137 = arith.mulf %134, %4 : vector<1x128xf32>
    %138 = arith.mulf %134, %6 : vector<1x128xf32>
    %139 = arith.select %136, %137, %138 : vector<1x128xi1>, vector<1x128xf32>
    %140 = vector.broadcast %134 : vector<1x128xf32> to vector<16x128xf32>
    %141 = arith.mulf %140, %0 : vector<16x128xf32>
    %142 = vector.broadcast %139 : vector<1x128xf32> to vector<16x128xf32>
    %143 = arith.subf %141, %142 : vector<16x128xf32>
    %144 = math.exp %143 : vector<16x128xf32>
    %cst_21 = arith.constant dense<0.000000e+00> : vector<128xf32>
    %145 = vector.multi_reduction <add>, %144, %cst_21 [0] : vector<16x128xf32> to vector<128xf32>
    %146 = vector.shape_cast %145 : vector<128xf32> to vector<1x128xf32>
    %147 = arith.mulf %144, %0 : vector<16x128xf32>
    %cst_22 = arith.constant dense<0.000000e+00> : vector<128xf32>
    %148 = vector.multi_reduction <add>, %147, %cst_22 [0] : vector<16x128xf32> to vector<128xf32>
    %149 = vector.shape_cast %148 : vector<128xf32> to vector<1x128xf32>
    %150 = arith.mulf %130, %149 : vector<1x128xf32>
    %151 = tpu.reciprocal %146 {approx = true} : vector<1x128xf32> -> vector<1x128xf32>
    %152 = arith.mulf %150, %151 : vector<1x128xf32>
    %153 = arith.addf %129, %152 : vector<1x128xf32>
    %154 = vector.extract_strided_slice %0 {offsets = [6, 0], sizes = [1, 128], strides = [1, 1]} : vector<16x128xf32> to vector<1x128xf32>
    %155 = vector.broadcast %1 : f32 to vector<1x128xf32>
    %156 = arith.mulf %155, %154 : vector<1x128xf32>
    %157 = vector.broadcast %2 : f32 to vector<1x128xf32>
    %158 = arith.addf %156, %157 : vector<1x128xf32>
    %cst_23 = arith.constant 0.000000e+00 : f32
    %159 = vector.broadcast %cst_23 : f32 to vector<1x128xf32>
    %160 = arith.cmpf oge, %158, %159 : vector<1x128xf32>
    %161 = arith.mulf %158, %4 : vector<1x128xf32>
    %162 = arith.mulf %158, %6 : vector<1x128xf32>
    %163 = arith.select %160, %161, %162 : vector<1x128xi1>, vector<1x128xf32>
    %164 = vector.broadcast %158 : vector<1x128xf32> to vector<16x128xf32>
    %165 = arith.mulf %164, %0 : vector<16x128xf32>
    %166 = vector.broadcast %163 : vector<1x128xf32> to vector<16x128xf32>
    %167 = arith.subf %165, %166 : vector<16x128xf32>
    %168 = math.exp %167 : vector<16x128xf32>
    %cst_24 = arith.constant dense<0.000000e+00> : vector<128xf32>
    %169 = vector.multi_reduction <add>, %168, %cst_24 [0] : vector<16x128xf32> to vector<128xf32>
    %170 = vector.shape_cast %169 : vector<128xf32> to vector<1x128xf32>
    %171 = arith.mulf %168, %0 : vector<16x128xf32>
    %cst_25 = arith.constant dense<0.000000e+00> : vector<128xf32>
    %172 = vector.multi_reduction <add>, %171, %cst_25 [0] : vector<16x128xf32> to vector<128xf32>
    %173 = vector.shape_cast %172 : vector<128xf32> to vector<1x128xf32>
    %174 = arith.mulf %154, %173 : vector<1x128xf32>
    %175 = tpu.reciprocal %170 {approx = true} : vector<1x128xf32> -> vector<1x128xf32>
    %176 = arith.mulf %174, %175 : vector<1x128xf32>
    %177 = arith.addf %153, %176 : vector<1x128xf32>
    %178 = vector.extract_strided_slice %0 {offsets = [7, 0], sizes = [1, 128], strides = [1, 1]} : vector<16x128xf32> to vector<1x128xf32>
    %179 = vector.broadcast %1 : f32 to vector<1x128xf32>
    %180 = arith.mulf %179, %178 : vector<1x128xf32>
    %181 = vector.broadcast %2 : f32 to vector<1x128xf32>
    %182 = arith.addf %180, %181 : vector<1x128xf32>
    %cst_26 = arith.constant 0.000000e+00 : f32
    %183 = vector.broadcast %cst_26 : f32 to vector<1x128xf32>
    %184 = arith.cmpf oge, %182, %183 : vector<1x128xf32>
    %185 = arith.mulf %182, %4 : vector<1x128xf32>
    %186 = arith.mulf %182, %6 : vector<1x128xf32>
    %187 = arith.select %184, %185, %186 : vector<1x128xi1>, vector<1x128xf32>
    %188 = vector.broadcast %182 : vector<1x128xf32> to vector<16x128xf32>
    %189 = arith.mulf %188, %0 : vector<16x128xf32>
    %190 = vector.broadcast %187 : vector<1x128xf32> to vector<16x128xf32>
    %191 = arith.subf %189, %190 : vector<16x128xf32>
    %192 = math.exp %191 : vector<16x128xf32>
    %cst_27 = arith.constant dense<0.000000e+00> : vector<128xf32>
    %193 = vector.multi_reduction <add>, %192, %cst_27 [0] : vector<16x128xf32> to vector<128xf32>
    %194 = vector.shape_cast %193 : vector<128xf32> to vector<1x128xf32>
    %195 = arith.mulf %192, %0 : vector<16x128xf32>
    %cst_28 = arith.constant dense<0.000000e+00> : vector<128xf32>
    %196 = vector.multi_reduction <add>, %195, %cst_28 [0] : vector<16x128xf32> to vector<128xf32>
    %197 = vector.shape_cast %196 : vector<128xf32> to vector<1x128xf32>
    %198 = arith.mulf %178, %197 : vector<1x128xf32>
    %199 = tpu.reciprocal %194 {approx = true} : vector<1x128xf32> -> vector<1x128xf32>
    %200 = arith.mulf %198, %199 : vector<1x128xf32>
    %201 = arith.addf %177, %200 : vector<1x128xf32>
    %202 = vector.extract_strided_slice %0 {offsets = [8, 0], sizes = [1, 128], strides = [1, 1]} : vector<16x128xf32> to vector<1x128xf32>
    %203 = vector.broadcast %1 : f32 to vector<1x128xf32>
    %204 = arith.mulf %203, %202 : vector<1x128xf32>
    %205 = vector.broadcast %2 : f32 to vector<1x128xf32>
    %206 = arith.addf %204, %205 : vector<1x128xf32>
    %cst_29 = arith.constant 0.000000e+00 : f32
    %207 = vector.broadcast %cst_29 : f32 to vector<1x128xf32>
    %208 = arith.cmpf oge, %206, %207 : vector<1x128xf32>
    %209 = arith.mulf %206, %4 : vector<1x128xf32>
    %210 = arith.mulf %206, %6 : vector<1x128xf32>
    %211 = arith.select %208, %209, %210 : vector<1x128xi1>, vector<1x128xf32>
    %212 = vector.broadcast %206 : vector<1x128xf32> to vector<16x128xf32>
    %213 = arith.mulf %212, %0 : vector<16x128xf32>
    %214 = vector.broadcast %211 : vector<1x128xf32> to vector<16x128xf32>
    %215 = arith.subf %213, %214 : vector<16x128xf32>
    %216 = math.exp %215 : vector<16x128xf32>
    %cst_30 = arith.constant dense<0.000000e+00> : vector<128xf32>
    %217 = vector.multi_reduction <add>, %216, %cst_30 [0] : vector<16x128xf32> to vector<128xf32>
    %218 = vector.shape_cast %217 : vector<128xf32> to vector<1x128xf32>
    %219 = arith.mulf %216, %0 : vector<16x128xf32>
    %cst_31 = arith.constant dense<0.000000e+00> : vector<128xf32>
    %220 = vector.multi_reduction <add>, %219, %cst_31 [0] : vector<16x128xf32> to vector<128xf32>
    %221 = vector.shape_cast %220 : vector<128xf32> to vector<1x128xf32>
    %222 = arith.mulf %202, %221 : vector<1x128xf32>
    %223 = tpu.reciprocal %218 {approx = true} : vector<1x128xf32> -> vector<1x128xf32>
    %224 = arith.mulf %222, %223 : vector<1x128xf32>
    %225 = arith.addf %201, %224 : vector<1x128xf32>
    %226 = vector.extract_strided_slice %0 {offsets = [9, 0], sizes = [1, 128], strides = [1, 1]} : vector<16x128xf32> to vector<1x128xf32>
    %227 = vector.broadcast %1 : f32 to vector<1x128xf32>
    %228 = arith.mulf %227, %226 : vector<1x128xf32>
    %229 = vector.broadcast %2 : f32 to vector<1x128xf32>
    %230 = arith.addf %228, %229 : vector<1x128xf32>
    %cst_32 = arith.constant 0.000000e+00 : f32
    %231 = vector.broadcast %cst_32 : f32 to vector<1x128xf32>
    %232 = arith.cmpf oge, %230, %231 : vector<1x128xf32>
    %233 = arith.mulf %230, %4 : vector<1x128xf32>
    %234 = arith.mulf %230, %6 : vector<1x128xf32>
    %235 = arith.select %232, %233, %234 : vector<1x128xi1>, vector<1x128xf32>
    %236 = vector.broadcast %230 : vector<1x128xf32> to vector<16x128xf32>
    %237 = arith.mulf %236, %0 : vector<16x128xf32>
    %238 = vector.broadcast %235 : vector<1x128xf32> to vector<16x128xf32>
    %239 = arith.subf %237, %238 : vector<16x128xf32>
    %240 = math.exp %239 : vector<16x128xf32>
    %cst_33 = arith.constant dense<0.000000e+00> : vector<128xf32>
    %241 = vector.multi_reduction <add>, %240, %cst_33 [0] : vector<16x128xf32> to vector<128xf32>
    %242 = vector.shape_cast %241 : vector<128xf32> to vector<1x128xf32>
    %243 = arith.mulf %240, %0 : vector<16x128xf32>
    %cst_34 = arith.constant dense<0.000000e+00> : vector<128xf32>
    %244 = vector.multi_reduction <add>, %243, %cst_34 [0] : vector<16x128xf32> to vector<128xf32>
    %245 = vector.shape_cast %244 : vector<128xf32> to vector<1x128xf32>
    %246 = arith.mulf %226, %245 : vector<1x128xf32>
    %247 = tpu.reciprocal %242 {approx = true} : vector<1x128xf32> -> vector<1x128xf32>
    %248 = arith.mulf %246, %247 : vector<1x128xf32>
    %249 = arith.addf %225, %248 : vector<1x128xf32>
    %250 = vector.extract_strided_slice %0 {offsets = [10, 0], sizes = [1, 128], strides = [1, 1]} : vector<16x128xf32> to vector<1x128xf32>
    %251 = vector.broadcast %1 : f32 to vector<1x128xf32>
    %252 = arith.mulf %251, %250 : vector<1x128xf32>
    %253 = vector.broadcast %2 : f32 to vector<1x128xf32>
    %254 = arith.addf %252, %253 : vector<1x128xf32>
    %cst_35 = arith.constant 0.000000e+00 : f32
    %255 = vector.broadcast %cst_35 : f32 to vector<1x128xf32>
    %256 = arith.cmpf oge, %254, %255 : vector<1x128xf32>
    %257 = arith.mulf %254, %4 : vector<1x128xf32>
    %258 = arith.mulf %254, %6 : vector<1x128xf32>
    %259 = arith.select %256, %257, %258 : vector<1x128xi1>, vector<1x128xf32>
    %260 = vector.broadcast %254 : vector<1x128xf32> to vector<16x128xf32>
    %261 = arith.mulf %260, %0 : vector<16x128xf32>
    %262 = vector.broadcast %259 : vector<1x128xf32> to vector<16x128xf32>
    %263 = arith.subf %261, %262 : vector<16x128xf32>
    %264 = math.exp %263 : vector<16x128xf32>
    %cst_36 = arith.constant dense<0.000000e+00> : vector<128xf32>
    %265 = vector.multi_reduction <add>, %264, %cst_36 [0] : vector<16x128xf32> to vector<128xf32>
    %266 = vector.shape_cast %265 : vector<128xf32> to vector<1x128xf32>
    %267 = arith.mulf %264, %0 : vector<16x128xf32>
    %cst_37 = arith.constant dense<0.000000e+00> : vector<128xf32>
    %268 = vector.multi_reduction <add>, %267, %cst_37 [0] : vector<16x128xf32> to vector<128xf32>
    %269 = vector.shape_cast %268 : vector<128xf32> to vector<1x128xf32>
    %270 = arith.mulf %250, %269 : vector<1x128xf32>
    %271 = tpu.reciprocal %266 {approx = true} : vector<1x128xf32> -> vector<1x128xf32>
    %272 = arith.mulf %270, %271 : vector<1x128xf32>
    %273 = arith.addf %249, %272 : vector<1x128xf32>
    %274 = vector.extract_strided_slice %0 {offsets = [11, 0], sizes = [1, 128], strides = [1, 1]} : vector<16x128xf32> to vector<1x128xf32>
    %275 = vector.broadcast %1 : f32 to vector<1x128xf32>
    %276 = arith.mulf %275, %274 : vector<1x128xf32>
    %277 = vector.broadcast %2 : f32 to vector<1x128xf32>
    %278 = arith.addf %276, %277 : vector<1x128xf32>
    %cst_38 = arith.constant 0.000000e+00 : f32
    %279 = vector.broadcast %cst_38 : f32 to vector<1x128xf32>
    %280 = arith.cmpf oge, %278, %279 : vector<1x128xf32>
    %281 = arith.mulf %278, %4 : vector<1x128xf32>
    %282 = arith.mulf %278, %6 : vector<1x128xf32>
    %283 = arith.select %280, %281, %282 : vector<1x128xi1>, vector<1x128xf32>
    %284 = vector.broadcast %278 : vector<1x128xf32> to vector<16x128xf32>
    %285 = arith.mulf %284, %0 : vector<16x128xf32>
    %286 = vector.broadcast %283 : vector<1x128xf32> to vector<16x128xf32>
    %287 = arith.subf %285, %286 : vector<16x128xf32>
    %288 = math.exp %287 : vector<16x128xf32>
    %cst_39 = arith.constant dense<0.000000e+00> : vector<128xf32>
    %289 = vector.multi_reduction <add>, %288, %cst_39 [0] : vector<16x128xf32> to vector<128xf32>
    %290 = vector.shape_cast %289 : vector<128xf32> to vector<1x128xf32>
    %291 = arith.mulf %288, %0 : vector<16x128xf32>
    %cst_40 = arith.constant dense<0.000000e+00> : vector<128xf32>
    %292 = vector.multi_reduction <add>, %291, %cst_40 [0] : vector<16x128xf32> to vector<128xf32>
    %293 = vector.shape_cast %292 : vector<128xf32> to vector<1x128xf32>
    %294 = arith.mulf %274, %293 : vector<1x128xf32>
    %295 = tpu.reciprocal %290 {approx = true} : vector<1x128xf32> -> vector<1x128xf32>
    %296 = arith.mulf %294, %295 : vector<1x128xf32>
    %297 = arith.addf %273, %296 : vector<1x128xf32>
    %298 = vector.extract_strided_slice %0 {offsets = [12, 0], sizes = [1, 128], strides = [1, 1]} : vector<16x128xf32> to vector<1x128xf32>
    %299 = vector.broadcast %1 : f32 to vector<1x128xf32>
    %300 = arith.mulf %299, %298 : vector<1x128xf32>
    %301 = vector.broadcast %2 : f32 to vector<1x128xf32>
    %302 = arith.addf %300, %301 : vector<1x128xf32>
    %cst_41 = arith.constant 0.000000e+00 : f32
    %303 = vector.broadcast %cst_41 : f32 to vector<1x128xf32>
    %304 = arith.cmpf oge, %302, %303 : vector<1x128xf32>
    %305 = arith.mulf %302, %4 : vector<1x128xf32>
    %306 = arith.mulf %302, %6 : vector<1x128xf32>
    %307 = arith.select %304, %305, %306 : vector<1x128xi1>, vector<1x128xf32>
    %308 = vector.broadcast %302 : vector<1x128xf32> to vector<16x128xf32>
    %309 = arith.mulf %308, %0 : vector<16x128xf32>
    %310 = vector.broadcast %307 : vector<1x128xf32> to vector<16x128xf32>
    %311 = arith.subf %309, %310 : vector<16x128xf32>
    %312 = math.exp %311 : vector<16x128xf32>
    %cst_42 = arith.constant dense<0.000000e+00> : vector<128xf32>
    %313 = vector.multi_reduction <add>, %312, %cst_42 [0] : vector<16x128xf32> to vector<128xf32>
    %314 = vector.shape_cast %313 : vector<128xf32> to vector<1x128xf32>
    %315 = arith.mulf %312, %0 : vector<16x128xf32>
    %cst_43 = arith.constant dense<0.000000e+00> : vector<128xf32>
    %316 = vector.multi_reduction <add>, %315, %cst_43 [0] : vector<16x128xf32> to vector<128xf32>
    %317 = vector.shape_cast %316 : vector<128xf32> to vector<1x128xf32>
    %318 = arith.mulf %298, %317 : vector<1x128xf32>
    %319 = tpu.reciprocal %314 {approx = true} : vector<1x128xf32> -> vector<1x128xf32>
    %320 = arith.mulf %318, %319 : vector<1x128xf32>
    %321 = arith.addf %297, %320 : vector<1x128xf32>
    %322 = vector.extract_strided_slice %0 {offsets = [13, 0], sizes = [1, 128], strides = [1, 1]} : vector<16x128xf32> to vector<1x128xf32>
    %323 = vector.broadcast %1 : f32 to vector<1x128xf32>
    %324 = arith.mulf %323, %322 : vector<1x128xf32>
    %325 = vector.broadcast %2 : f32 to vector<1x128xf32>
    %326 = arith.addf %324, %325 : vector<1x128xf32>
    %cst_44 = arith.constant 0.000000e+00 : f32
    %327 = vector.broadcast %cst_44 : f32 to vector<1x128xf32>
    %328 = arith.cmpf oge, %326, %327 : vector<1x128xf32>
    %329 = arith.mulf %326, %4 : vector<1x128xf32>
    %330 = arith.mulf %326, %6 : vector<1x128xf32>
    %331 = arith.select %328, %329, %330 : vector<1x128xi1>, vector<1x128xf32>
    %332 = vector.broadcast %326 : vector<1x128xf32> to vector<16x128xf32>
    %333 = arith.mulf %332, %0 : vector<16x128xf32>
    %334 = vector.broadcast %331 : vector<1x128xf32> to vector<16x128xf32>
    %335 = arith.subf %333, %334 : vector<16x128xf32>
    %336 = math.exp %335 : vector<16x128xf32>
    %cst_45 = arith.constant dense<0.000000e+00> : vector<128xf32>
    %337 = vector.multi_reduction <add>, %336, %cst_45 [0] : vector<16x128xf32> to vector<128xf32>
    %338 = vector.shape_cast %337 : vector<128xf32> to vector<1x128xf32>
    %339 = arith.mulf %336, %0 : vector<16x128xf32>
    %cst_46 = arith.constant dense<0.000000e+00> : vector<128xf32>
    %340 = vector.multi_reduction <add>, %339, %cst_46 [0] : vector<16x128xf32> to vector<128xf32>
    %341 = vector.shape_cast %340 : vector<128xf32> to vector<1x128xf32>
    %342 = arith.mulf %322, %341 : vector<1x128xf32>
    %343 = tpu.reciprocal %338 {approx = true} : vector<1x128xf32> -> vector<1x128xf32>
    %344 = arith.mulf %342, %343 : vector<1x128xf32>
    %345 = arith.addf %321, %344 : vector<1x128xf32>
    %346 = vector.extract_strided_slice %0 {offsets = [14, 0], sizes = [1, 128], strides = [1, 1]} : vector<16x128xf32> to vector<1x128xf32>
    %347 = vector.broadcast %1 : f32 to vector<1x128xf32>
    %348 = arith.mulf %347, %346 : vector<1x128xf32>
    %349 = vector.broadcast %2 : f32 to vector<1x128xf32>
    %350 = arith.addf %348, %349 : vector<1x128xf32>
    %cst_47 = arith.constant 0.000000e+00 : f32
    %351 = vector.broadcast %cst_47 : f32 to vector<1x128xf32>
    %352 = arith.cmpf oge, %350, %351 : vector<1x128xf32>
    %353 = arith.mulf %350, %4 : vector<1x128xf32>
    %354 = arith.mulf %350, %6 : vector<1x128xf32>
    %355 = arith.select %352, %353, %354 : vector<1x128xi1>, vector<1x128xf32>
    %356 = vector.broadcast %350 : vector<1x128xf32> to vector<16x128xf32>
    %357 = arith.mulf %356, %0 : vector<16x128xf32>
    %358 = vector.broadcast %355 : vector<1x128xf32> to vector<16x128xf32>
    %359 = arith.subf %357, %358 : vector<16x128xf32>
    %360 = math.exp %359 : vector<16x128xf32>
    %cst_48 = arith.constant dense<0.000000e+00> : vector<128xf32>
    %361 = vector.multi_reduction <add>, %360, %cst_48 [0] : vector<16x128xf32> to vector<128xf32>
    %362 = vector.shape_cast %361 : vector<128xf32> to vector<1x128xf32>
    %363 = arith.mulf %360, %0 : vector<16x128xf32>
    %cst_49 = arith.constant dense<0.000000e+00> : vector<128xf32>
    %364 = vector.multi_reduction <add>, %363, %cst_49 [0] : vector<16x128xf32> to vector<128xf32>
    %365 = vector.shape_cast %364 : vector<128xf32> to vector<1x128xf32>
    %366 = arith.mulf %346, %365 : vector<1x128xf32>
    %367 = tpu.reciprocal %362 {approx = true} : vector<1x128xf32> -> vector<1x128xf32>
    %368 = arith.mulf %366, %367 : vector<1x128xf32>
    %369 = arith.addf %345, %368 : vector<1x128xf32>
    %370 = vector.extract_strided_slice %0 {offsets = [15, 0], sizes = [1, 128], strides = [1, 1]} : vector<16x128xf32> to vector<1x128xf32>
    %371 = vector.broadcast %1 : f32 to vector<1x128xf32>
    %372 = arith.mulf %371, %370 : vector<1x128xf32>
    %373 = vector.broadcast %2 : f32 to vector<1x128xf32>
    %374 = arith.addf %372, %373 : vector<1x128xf32>
    %cst_50 = arith.constant 0.000000e+00 : f32
    %375 = vector.broadcast %cst_50 : f32 to vector<1x128xf32>
    %376 = arith.cmpf oge, %374, %375 : vector<1x128xf32>
    %377 = arith.mulf %374, %4 : vector<1x128xf32>
    %378 = arith.mulf %374, %6 : vector<1x128xf32>
    %379 = arith.select %376, %377, %378 : vector<1x128xi1>, vector<1x128xf32>
    %380 = vector.broadcast %374 : vector<1x128xf32> to vector<16x128xf32>
    %381 = arith.mulf %380, %0 : vector<16x128xf32>
    %382 = vector.broadcast %379 : vector<1x128xf32> to vector<16x128xf32>
    %383 = arith.subf %381, %382 : vector<16x128xf32>
    %384 = math.exp %383 : vector<16x128xf32>
    %cst_51 = arith.constant dense<0.000000e+00> : vector<128xf32>
    %385 = vector.multi_reduction <add>, %384, %cst_51 [0] : vector<16x128xf32> to vector<128xf32>
    %386 = vector.shape_cast %385 : vector<128xf32> to vector<1x128xf32>
    %387 = arith.mulf %384, %0 : vector<16x128xf32>
    %cst_52 = arith.constant dense<0.000000e+00> : vector<128xf32>
    %388 = vector.multi_reduction <add>, %387, %cst_52 [0] : vector<16x128xf32> to vector<128xf32>
    %389 = vector.shape_cast %388 : vector<128xf32> to vector<1x128xf32>
    %390 = arith.mulf %370, %389 : vector<1x128xf32>
    %391 = tpu.reciprocal %386 {approx = true} : vector<1x128xf32> -> vector<1x128xf32>
    %392 = arith.mulf %390, %391 : vector<1x128xf32>
    %393 = arith.addf %369, %392 : vector<1x128xf32>
    %c0_53 = arith.constant 0 : index
    %c0_54 = arith.constant 0 : index
    %394 = vector.load %arg3[%c0_53, %c0_54] : memref<256x1xf32, #tpu.memory_space<vmem>>, vector<256x1xf32>
    %395 = vector.broadcast %394 : vector<256x1xf32> to vector<256x128xf32>
    %396 = vector.broadcast %393 : vector<1x128xf32> to vector<256x128xf32>
    %397 = arith.mulf %395, %396 : vector<256x128xf32>
    %c0_55 = arith.constant 0 : index
    %c0_56 = arith.constant 0 : index
    %398 = vector.load %arg4[%c0_55, %c0_56] : memref<256x1xf32, #tpu.memory_space<vmem>>, vector<256x1xf32>
    %399 = vector.broadcast %398 : vector<256x1xf32> to vector<256x128xf32>
    %400 = vector.broadcast %8 : vector<1x128xf32> to vector<256x128xf32>
    %401 = arith.mulf %399, %400 : vector<256x128xf32>
    %402 = arith.addf %397, %401 : vector<256x128xf32>
    %cst_57 = arith.constant 0.000000e+00 : f32
    %403 = vector.broadcast %cst_57 : f32 to vector<256x128xf32>
    %404 = arith.maximumf %402, %403 : vector<256x128xf32>
    %405 = math.rsqrt %404 : vector<256x128xf32>
    %406 = tpu.transpose %405, [1, 0] : vector<256x128xf32> -> vector<128x256xf32>
    %407 = arith.truncf %406 : vector<128x256xf32> to vector<128x256xbf16>
    %c0_58 = arith.constant 0 : index
    %c0_59 = arith.constant 0 : index
    %408 = vector.load %arg5[%c0_58, %c0_59] : memref<256x256xbf16, #tpu.memory_space<vmem>>, vector<256x256xbf16>
    %cst_60 = arith.constant dense<0.000000e+00> : vector<128x256xf32>
    %409 = tpu.matmul %407, %408, %cst_60 {dimension_numbers = #tpu.dot_dimension_numbers<[1], [0], [0], [1], [0, 0, 1, 1], [], []>} : vector<128x256xbf16>, vector<256x256xbf16>, vector<128x256xf32> -> vector<128x256xf32>
    %c0_61 = arith.constant 0 : index
    %c0_62 = arith.constant 0 : index
    %410 = vector.load %arg6[%c0_61, %c0_62] : memref<1x256xf32, #tpu.memory_space<vmem>>, vector<1x256xf32>
    %411 = vector.broadcast %410 : vector<1x256xf32> to vector<128x256xf32>
    %412 = arith.addf %409, %411 : vector<128x256xf32>
    %c0_63 = arith.constant 0 : index
    %c0_64 = arith.constant 0 : index
    %413 = vector.load %arg7[%c0_63, %c0_64] : memref<128x256xf32, #tpu.memory_space<vmem>>, vector<128x256xf32>
    tpu.vector_store %arg7[%c0_63, %c0_64], %412 {strides = array<i32>} : memref<128x256xf32, #tpu.memory_space<vmem>>, vector<128x256xf32>,
    %c0_i32 = arith.constant 0 : i32
    %414 = arith.cmpi eq, %arg0, %c0_i32 : i32
    %415 = arith.extui %414 : i1 to i32
    %c0_i32_65 = arith.constant 0 : i32
    %416 = arith.cmpi ne, %415, %c0_i32_65 : i32
    scf.if %416 {
      %c0_66 = arith.constant 0 : index
      %c0_67 = arith.constant 0 : index
      %417 = vector.load %arg6[%c0_66, %c0_67] : memref<1x256xf32, #tpu.memory_space<vmem>>, vector<1x256xf32>
      %c0_68 = arith.constant 0 : index
      %c0_69 = arith.constant 0 : index
      %418 = vector.load %arg7[%c0_68, %c0_69] : memref<128x256xf32, #tpu.memory_space<vmem>>, vector<1x256xf32>
      tpu.vector_store %arg7[%c0_68, %c0_69], %417 {strides = array<i32>} : memref<128x256xf32, #tpu.memory_space<vmem>>, vector<1x256xf32>,
    } else {
    }
    return
  }
  func.func @transform_0(%arg0: i32) -> i32 {
    %c0_i32 = arith.constant 0 : i32
    %c0_i32_0 = arith.constant 0 : i32
    return %c0_i32 : i32
  }
  func.func @transform_1(%arg0: i32) -> (i32, i32) {
    %c0_i32 = arith.constant 0 : i32
    %c0_i32_0 = arith.constant 0 : i32
    return %c0_i32, %arg0 : i32, i32
  }
  func.func @transform_2(%arg0: i32) -> (i32, i32) {
    %c0_i32 = arith.constant 0 : i32
    %c0_i32_0 = arith.constant 0 : i32
    %c0_i32_1 = arith.constant 0 : i32
    return %c0_i32, %c0_i32_0 : i32, i32
  }
  func.func @transform_3(%arg0: i32) -> (i32, i32) {
    %c0_i32 = arith.constant 0 : i32
    %c0_i32_0 = arith.constant 0 : i32
    %c0_i32_1 = arith.constant 0 : i32
    return %c0_i32, %c0_i32_0 : i32, i32
  }
  func.func @transform_4(%arg0: i32) -> (i32, i32) {
    %c0_i32 = arith.constant 0 : i32
    %c0_i32_0 = arith.constant 0 : i32
    %c0_i32_1 = arith.constant 0 : i32
    return %c0_i32, %c0_i32_0 : i32, i32
  }
  func.func @transform_5(%arg0: i32) -> (i32, i32) {
    %c0_i32 = arith.constant 0 : i32
    %c0_i32_0 = arith.constant 0 : i32
    %c0_i32_1 = arith.constant 0 : i32
    return %c0_i32, %c0_i32_0 : i32, i32
  }
  func.func @transform_6(%arg0: i32) -> (i32, i32) {
    %c0_i32 = arith.constant 0 : i32
    %c0_i32_0 = arith.constant 0 : i32
    return %arg0, %c0_i32 : i32, i32
  }
}

</mosaic_0001>

<llo_original>
// kernel: tpu_custom_call.1
$region0: #{tpu_custom_call.1}
  #allocation0 [shape = 'u32[]', space=smem, size = 0x4, offset = 0x4, fixed_abs, tag = 'smem constant byte address 0x4 - core index']
  #allocation1 [shape = 'u32[144,128]{1,0:T(1,128)}', space=vmem, size = 0x12000, scoped, tag = 'internal scratch']
  %s0 = inlined_call_operand.vmem [shape: f32[2], index: 0, kind: input, shape index: {}]
  %s1 = inlined_call_operand.vmem [shape: f32[16,128], index: 1, kind: input, shape index: {}]
  %s2 = inlined_call_operand.vmem [shape: f32[256,1], index: 2, kind: input, shape index: {}]
  %s3 = inlined_call_operand.vmem [shape: f32[256,1], index: 3, kind: input, shape index: {}]
  %s4 = inlined_call_operand.vmem [shape: bf16[256,256], index: 4, kind: input, shape index: {}]
  %s5 = inlined_call_operand.vmem [shape: f32[1,256], index: 5, kind: input, shape index: {}]
  %s6 = inlined_call_operand.hbm [shape: f32[128,256], index: 6, kind: output, shape index: {}]
  %s7 = sld [smem:[#allocation0]]
  $region42: #{tpu_custom_call.1} parent=0
    _
  %s9 = ssub.s32 1, %s7
  %s10 = scalar_select 0, %s9, %s7
  $region1: #{tpu_custom_call.1} parent=0
    #allocation2 [shape = 'u8[512]{0}', space=smem, size = 0x200, scoped, tag = 'input window, operand 0, single buffered']
    #allocation3 [shape = 's32[1]{0}', space=sflag, size = 0x4, scoped, tag = 'scoped memory for tpu_custom_call.1']
    #allocation4 [shape = 's32[1]{0}', space=sflag, size = 0x4, scoped, tag = 'scoped memory for tpu_custom_call.1']
    #allocation5 [shape = 'u8[131072]{0}', space=vmem, size = 0x20000, scoped, tag = 'output window, operand 0, single buffered']
    %11 = vsyncpa [#allocation4], 0
    %12 = vsyncpa [#allocation3], 0
    // Predicated region
    $region2: #{tpu_custom_call.1} parent=1 // pred_check
      _
    $region3: #{tpu_custom_call.1} parent=1 // pred_check_branch
      %14 = sbr.rel (0) target = $region5
    $region4: #{tpu_custom_call.1} parent=1 // pred_region
      %s16 = ssub.s32 16, 16
      %17 = vsyncadd [#allocation4], %s16
      %s19 = sshll.u32 %s0, 4
      %s20 = int_to_ptr.vmem [resolvable:$true] %s19
      %22 = dma.vmem_to_smem %s20, 16, [#allocation2], [#allocation4]
    $region5: #{tpu_custom_call.1} parent=1 // pred_fallthru
      _
    // Predicated region
    $region6: #{tpu_custom_call.1} parent=1 // pred_check
      _
    $region7: #{tpu_custom_call.1} parent=1 // pred_check_branch
      %24 = sbr.rel (0) target = $region9
    $region8: #{tpu_custom_call.1} parent=1 // pred_region
      _
    $region9: #{tpu_custom_call.1} parent=1 // pred_fallthru
      _
    // Predicated region
    $region10: #{tpu_custom_call.1} parent=1 // pred_check
      _
    $region11: #{tpu_custom_call.1} parent=1 // pred_check_branch
      %26 = sbr.rel (0) target = $region13
    $region12: #{tpu_custom_call.1} parent=1 // pred_region
      _
    $region13: #{tpu_custom_call.1} parent=1 // pred_fallthru
      _
    // Predicated region
    $region14: #{tpu_custom_call.1} parent=1 // pred_check
      _
    $region15: #{tpu_custom_call.1} parent=1 // pred_check_branch
      %28 = sbr.rel (0) target = $region17
    $region16: #{tpu_custom_call.1} parent=1 // pred_region
      _
    $region17: #{tpu_custom_call.1} parent=1 // pred_fallthru
      _
    // Predicated region
    $region18: #{tpu_custom_call.1} parent=1 // pred_check
      _
    $region19: #{tpu_custom_call.1} parent=1 // pred_check_branch
      %30 = sbr.rel (0) target = $region21
    $region20: #{tpu_custom_call.1} parent=1 // pred_region
      _
    $region21: #{tpu_custom_call.1} parent=1 // pred_fallthru
      _
    // Predicated region
    $region22: #{tpu_custom_call.1} parent=1 // pred_check
      _
    $region23: #{tpu_custom_call.1} parent=1 // pred_check_branch
      %32 = sbr.rel (0) target = $region25
    $region24: #{tpu_custom_call.1} parent=1 // pred_region
      _
    $region25: #{tpu_custom_call.1} parent=1 // pred_fallthru
      _
    // Predicated region
    $region26: #{tpu_custom_call.1} parent=1 // pred_check
      _
    $region27: #{tpu_custom_call.1} parent=1 // pred_check_branch
      %34 = sbr.rel (0) target = $region29
    $region28: #{tpu_custom_call.1} parent=1 // pred_region
      %35 = dma.done [#allocation4], 16
    $region29: #{tpu_custom_call.1} parent=1 // pred_fallthru
      _
    %36 = sfence
    %v37 = vld [vmem:[%s1] sm:$0xff]
    %v38 = vld [vmem:[%s1 + $0x8] sm:$0xff]
    %s39 = sld [smem:[#allocation2]]
    %s40 = sld [smem:[#allocation2 + $0x1]]
    %v41 = vmax.f32 %v37, %v38
    %v42 = vrot.slane %v41, 4
    %v43 = vmax.f32 %v41, %v42
    %v44 = vrot.slane %v43, 2
    %v45 = vmax.f32 %v43, %v44
    %v46 = vrot.slane %v45, 1
    %v47 = vmax.f32 %v45, %v46
    %v48 = vmin.f32 %v37, %v38
    %v49 = vrot.slane %v48, 4
    %v50 = vmin.f32 %v48, %v49
    %v51 = vrot.slane %v50, 2
    %v52 = vmin.f32 %v50, %v51
    %v53 = vrot.slane %v52, 1
    %v54 = vmin.f32 %v52, %v53
    %v55 = vadd.f32 %v37, %v38
    %v56 = vrot.slane %v55, 4
    %v57 = vadd.f32 %v55, %v56
    %v58 = vrot.slane %v57, 2
    %v59 = vadd.f32 %v57, %v58
    %v60 = vrot.slane %v59, 1
    %v61 = vadd.f32 %v59, %v60
    %v62 = vstv %s39
    %v63 = vmul.f32 %v62, %v37
    %v64 = vstv %s40
    %v65 = vadd.f32 %v63, %v64
    %vm66 = vcmp.ge.f32.partialorder %v65, 0.0
    %v67 = vmul.f32 %v65, %v47
    %v68 = vmul.f32 %v65, %v54
    %v69 = vsel %vm66, %v67, %v68
    %v70 = vlaneseq
    %v71 = vshrl.u32 %v70, 7
    %v72 = vsub.s32 0, %v71
    %v73 = vrot.slane %v65, %v72
    %v74 = vmul.f32 %v73, %v37
    %v75 = vmul.f32 %v73, %v38
    %v76 = vlaneseq
    %v77 = vshrl.u32 %v76, 7
    %v78 = vsub.s32 0, %v77
    %v79 = vrot.slane %v69, %v78
    %v80 = vsub.f32 %v74, %v79
    %v81 = vsub.f32 %v75, %v79
    %v82 = vmul.f32 %v80, 1.442695
    %v83 = vpow.pop %v82
    %v84 = vmul.f32 %v81, 1.442695
    %v85 = vpow.pop %v84
    %v86 = vadd.f32 %v83, %v85
    %v87 = vrot.slane %v86, 4
    %v88 = vadd.f32 %v86, %v87
    %v89 = vrot.slane %v88, 2
    %v90 = vadd.f32 %v88, %v89
    %v91 = vrot.slane %v90, 1
    %v92 = vadd.f32 %v90, %v91
    %v93 = vmul.f32 %v83, %v37
    %v94 = vmul.f32 %v85, %v38
    %v95 = vadd.f32 %v93, %v94
    %v96 = vrot.slane %v95, 4
    %v97 = vadd.f32 %v95, %v96
    %v98 = vrot.slane %v97, 2
    %v99 = vadd.f32 %v97, %v98
    %v100 = vrot.slane %v99, 1
    %v101 = vadd.f32 %v99, %v100
    %v102 = vmul.f32 %v37, %v101
    %v103 = vrcp.pop %v92
    %v104 = vmul.f32 %v102, %v103
    %v105 = vadd.f32 %v104, 0.0
    %v106 = vlaneseq
    %v107 = vshrl.u32 %v106, 7
    %v108 = vsub.s32 1, %v107
    %v109 = vrot.slane %v65, %v108
    %v110 = vmul.f32 %v109, %v37
    %v111 = vmul.f32 %v109, %v38
    %v112 = vlaneseq
    %v113 = vshrl.u32 %v112, 7
    %v114 = vsub.s32 1, %v113
    %v115 = vrot.slane %v69, %v114
    %v116 = vsub.f32 %v110, %v115
    %v117 = vsub.f32 %v111, %v115
    %v118 = vmul.f32 %v116, 1.442695
    %v119 = vpow.pop %v118
    %v120 = vmul.f32 %v117, 1.442695
    %v121 = vpow.pop %v120
    %v122 = vadd.f32 %v119, %v121
    %v123 = vrot.slane %v122, 4
    %v124 = vadd.f32 %v122, %v123
    %v125 = vrot.slane %v124, 2
    %v126 = vadd.f32 %v124, %v125
    %v127 = vrot.slane %v126, 1
    %v128 = vadd.f32 %v126, %v127
    %v129 = vmul.f32 %v119, %v37
    %v130 = vmul.f32 %v121, %v38
    %v131 = vadd.f32 %v129, %v130
    %v132 = vrot.slane %v131, 4
    %v133 = vadd.f32 %v131, %v132
    %v134 = vrot.slane %v133, 2
    %v135 = vadd.f32 %v133, %v134
    %v136 = vrot.slane %v135, 1
    %v137 = vadd.f32 %v135, %v136
    %v138 = vmul.f32 %v37, %v137
    %v139 = vrcp.pop %v128
    %v140 = vmul.f32 %v138, %v139
    %v142 = vrot.slane %v140, 1
    %v144 = vadd.f32 %v105, %v142
    %v145 = vlaneseq
    %v146 = vshrl.u32 %v145, 7
    %v147 = vsub.s32 2, %v146
    %v148 = vrot.slane %v65, %v147
    %v149 = vmul.f32 %v148, %v37
    %v150 = vmul.f32 %v148, %v38
    %v151 = vlaneseq
    %v152 = vshrl.u32 %v151, 7
    %v153 = vsub.s32 2, %v152
    %v154 = vrot.slane %v69, %v153
    %v155 = vsub.f32 %v149, %v154
    %v156 = vsub.f32 %v150, %v154
    %v157 = vmul.f32 %v155, 1.442695
    %v158 = vpow.pop %v157
    %v159 = vmul.f32 %v156, 1.442695
    %v160 = vpow.pop %v159
    %v161 = vadd.f32 %v158, %v160
    %v162 = vrot.slane %v161, 4
    %v163 = vadd.f32 %v161, %v162
    %v164 = vrot.slane %v163, 2
    %v165 = vadd.f32 %v163, %v164
    %v166 = vrot.slane %v165, 1
    %v167 = vadd.f32 %v165, %v166
    %v168 = vmul.f32 %v158, %v37
    %v169 = vmul.f32 %v160, %v38
    %v170 = vadd.f32 %v168, %v169
    %v171 = vrot.slane %v170, 4
    %v172 = vadd.f32 %v170, %v171
    %v173 = vrot.slane %v172, 2
    %v174 = vadd.f32 %v172, %v173
    %v175 = vrot.slane %v174, 1
    %v176 = vadd.f32 %v174, %v175
    %v177 = vmul.f32 %v37, %v176
    %v178 = vrcp.pop %v167
    %v179 = vmul.f32 %v177, %v178
    %v181 = vrot.slane %v179, 2
    %v183 = vadd.f32 %v144, %v181
    %v184 = vlaneseq
    %v185 = vshrl.u32 %v184, 7
    %v186 = vsub.s32 3, %v185
    %v187 = vrot.slane %v65, %v186
    %v188 = vmul.f32 %v187, %v37
    %v189 = vmul.f32 %v187, %v38
    %v190 = vlaneseq
    %v191 = vshrl.u32 %v190, 7
    %v192 = vsub.s32 3, %v191
    %v193 = vrot.slane %v69, %v192
    %v194 = vsub.f32 %v188, %v193
    %v195 = vsub.f32 %v189, %v193
    %v196 = vmul.f32 %v194, 1.442695
    %v197 = vpow.pop %v196
    %v198 = vmul.f32 %v195, 1.442695
    %v199 = vpow.pop %v198
    %v200 = vadd.f32 %v197, %v199
    %v201 = vrot.slane %v200, 4
    %v202 = vadd.f32 %v200, %v201
    %v203 = vrot.slane %v202, 2
    %v204 = vadd.f32 %v202, %v203
    %v205 = vrot.slane %v204, 1
    %v206 = vadd.f32 %v204, %v205
    %v207 = vmul.f32 %v197, %v37
    %v208 = vmul.f32 %v199, %v38
    %v209 = vadd.f32 %v207, %v208
    %v210 = vrot.slane %v209, 4
    %v211 = vadd.f32 %v209, %v210
    %v212 = vrot.slane %v211, 2
    %v213 = vadd.f32 %v211, %v212
    %v214 = vrot.slane %v213, 1
    %v215 = vadd.f32 %v213, %v214
    %v216 = vmul.f32 %v37, %v215
    %v217 = vrcp.pop %v206
    %v218 = vmul.f32 %v216, %v217
    %v220 = vrot.slane %v218, 3
    %v222 = vadd.f32 %v183, %v220
    %v223 = vlaneseq
    %v224 = vshrl.u32 %v223, 7
    %v225 = vsub.s32 4, %v224
    %v226 = vrot.slane %v65, %v225
    %v227 = vmul.f32 %v226, %v37
    %v228 = vmul.f32 %v226, %v38
    %v229 = vlaneseq
    %v230 = vshrl.u32 %v229, 7
    %v231 = vsub.s32 4, %v230
    %v232 = vrot.slane %v69, %v231
    %v233 = vsub.f32 %v227, %v232
    %v234 = vsub.f32 %v228, %v232
    %v235 = vmul.f32 %v233, 1.442695
    %v236 = vpow.pop %v235
    %v237 = vmul.f32 %v234, 1.442695
    %v238 = vpow.pop %v237
    %v239 = vadd.f32 %v236, %v238
    %v240 = vrot.slane %v239, 4
    %v241 = vadd.f32 %v239, %v240
    %v242 = vrot.slane %v241, 2
    %v243 = vadd.f32 %v241, %v242
    %v244 = vrot.slane %v243, 1
    %v245 = vadd.f32 %v243, %v244
    %v246 = vmul.f32 %v236, %v37
    %v247 = vmul.f32 %v238, %v38
    %v248 = vadd.f32 %v246, %v247
    %v249 = vrot.slane %v248, 4
    %v250 = vadd.f32 %v248, %v249
    %v251 = vrot.slane %v250, 2
    %v252 = vadd.f32 %v250, %v251
    %v253 = vrot.slane %v252, 1
    %v254 = vadd.f32 %v252, %v253
    %v255 = vmul.f32 %v37, %v254
    %v256 = vrcp.pop %v245
    %v257 = vmul.f32 %v255, %v256
    %v259 = vrot.slane %v257, 4
    %v261 = vadd.f32 %v222, %v259
    %v262 = vlaneseq
    %v263 = vshrl.u32 %v262, 7
    %v264 = vsub.s32 5, %v263
    %v265 = vrot.slane %v65, %v264
    %v266 = vmul.f32 %v265, %v37
    %v267 = vmul.f32 %v265, %v38
    %v268 = vlaneseq
    %v269 = vshrl.u32 %v268, 7
    %v270 = vsub.s32 5, %v269
    %v271 = vrot.slane %v69, %v270
    %v272 = vsub.f32 %v266, %v271
    %v273 = vsub.f32 %v267, %v271
    %v274 = vmul.f32 %v272, 1.442695
    %v275 = vpow.pop %v274
    %v276 = vmul.f32 %v273, 1.442695
    %v277 = vpow.pop %v276
    %v278 = vadd.f32 %v275, %v277
    %v279 = vrot.slane %v278, 4
    %v280 = vadd.f32 %v278, %v279
    %v281 = vrot.slane %v280, 2
    %v282 = vadd.f32 %v280, %v281
    %v283 = vrot.slane %v282, 1
    %v284 = vadd.f32 %v282, %v283
    %v285 = vmul.f32 %v275, %v37
    %v286 = vmul.f32 %v277, %v38
    %v287 = vadd.f32 %v285, %v286
    %v288 = vrot.slane %v287, 4
    %v289 = vadd.f32 %v287, %v288
    %v290 = vrot.slane %v289, 2
    %v291 = vadd.f32 %v289, %v290
    %v292 = vrot.slane %v291, 1
    %v293 = vadd.f32 %v291, %v292
    %v294 = vmul.f32 %v37, %v293
    %v295 = vrcp.pop %v284
    %v296 = vmul.f32 %v294, %v295
    %v298 = vrot.slane %v296, 5
    %v300 = vadd.f32 %v261, %v298
    %v301 = vlaneseq
    %v302 = vshrl.u32 %v301, 7
    %v303 = vsub.s32 6, %v302
    %v304 = vrot.slane %v65, %v303
    %v305 = vmul.f32 %v304, %v37
    %v306 = vmul.f32 %v304, %v38
    %v307 = vlaneseq
    %v308 = vshrl.u32 %v307, 7
    %v309 = vsub.s32 6, %v308
    %v310 = vrot.slane %v69, %v309
    %v311 = vsub.f32 %v305, %v310
    %v312 = vsub.f32 %v306, %v310
    %v313 = vmul.f32 %v311, 1.442695
    %v314 = vpow.pop %v313
    %v315 = vmul.f32 %v312, 1.442695
    %v316 = vpow.pop %v315
    %v317 = vadd.f32 %v314, %v316
    %v318 = vrot.slane %v317, 4
    %v319 = vadd.f32 %v317, %v318
    %v320 = vrot.slane %v319, 2
    %v321 = vadd.f32 %v319, %v320
    %v322 = vrot.slane %v321, 1
    %v323 = vadd.f32 %v321, %v322
    %v324 = vmul.f32 %v314, %v37
    %v325 = vmul.f32 %v316, %v38
    %v326 = vadd.f32 %v324, %v325
    %v327 = vrot.slane %v326, 4
    %v328 = vadd.f32 %v326, %v327
    %v329 = vrot.slane %v328, 2
    %v330 = vadd.f32 %v328, %v329
    %v331 = vrot.slane %v330, 1
    %v332 = vadd.f32 %v330, %v331
    %v333 = vmul.f32 %v37, %v332
    %v334 = vrcp.pop %v323
    %v335 = vmul.f32 %v333, %v334
    %v337 = vrot.slane %v335, 6
    %v339 = vadd.f32 %v300, %v337
    %v340 = vlaneseq
    %v341 = vshrl.u32 %v340, 7
    %v342 = vsub.s32 7, %v341
    %v343 = vrot.slane %v65, %v342
    %v344 = vmul.f32 %v343, %v37
    %v345 = vmul.f32 %v343, %v38
    %v346 = vlaneseq
    %v347 = vshrl.u32 %v346, 7
    %v348 = vsub.s32 7, %v347
    %v349 = vrot.slane %v69, %v348
    %v350 = vsub.f32 %v344, %v349
    %v351 = vsub.f32 %v345, %v349
    %v352 = vmul.f32 %v350, 1.442695
    %v353 = vpow.pop %v352
    %v354 = vmul.f32 %v351, 1.442695
    %v355 = vpow.pop %v354
    %v356 = vadd.f32 %v353, %v355
    %v357 = vrot.slane %v356, 4
    %v358 = vadd.f32 %v356, %v357
    %v359 = vrot.slane %v358, 2
    %v360 = vadd.f32 %v358, %v359
    %v361 = vrot.slane %v360, 1
    %v362 = vadd.f32 %v360, %v361
    %v363 = vmul.f32 %v353, %v37
    %v364 = vmul.f32 %v355, %v38
    %v365 = vadd.f32 %v363, %v364
    %v366 = vrot.slane %v365, 4
    %v367 = vadd.f32 %v365, %v366
    %v368 = vrot.slane %v367, 2
    %v369 = vadd.f32 %v367, %v368
    %v370 = vrot.slane %v369, 1
    %v371 = vadd.f32 %v369, %v370
    %v372 = vmul.f32 %v37, %v371
    %v373 = vrcp.pop %v362
    %v374 = vmul.f32 %v372, %v373
    %v376 = vrot.slane %v374, 7
    %v378 = vadd.f32 %v339, %v376
    %v379 = vmul.f32 %v62, %v38
    %v380 = vadd.f32 %v379, %v64
    %vm381 = vcmp.ge.f32.partialorder %v380, 0.0
    %v382 = vmul.f32 %v380, %v47
    %v383 = vmul.f32 %v380, %v54
    %v384 = vsel %vm381, %v382, %v383
    %v385 = vlaneseq
    %v386 = vshrl.u32 %v385, 7
    %v387 = vsub.s32 0, %v386
    %v388 = vrot.slane %v380, %v387
    %v389 = vmul.f32 %v388, %v37
    %v390 = vmul.f32 %v388, %v38
    %v391 = vlaneseq
    %v392 = vshrl.u32 %v391, 7
    %v393 = vsub.s32 0, %v392
    %v394 = vrot.slane %v384, %v393
    %v395 = vsub.f32 %v389, %v394
    %v396 = vsub.f32 %v390, %v394
    %v397 = vmul.f32 %v395, 1.442695
    %v398 = vpow.pop %v397
    %v399 = vmul.f32 %v396, 1.442695
    %v400 = vpow.pop %v399
    %v401 = vadd.f32 %v398, %v400
    %v402 = vrot.slane %v401, 4
    %v403 = vadd.f32 %v401, %v402
    %v404 = vrot.slane %v403, 2
    %v405 = vadd.f32 %v403, %v404
    %v406 = vrot.slane %v405, 1
    %v407 = vadd.f32 %v405, %v406
    %v408 = vmul.f32 %v398, %v37
    %v409 = vmul.f32 %v400, %v38
    %v410 = vadd.f32 %v408, %v409
    %v411 = vrot.slane %v410, 4
    %v412 = vadd.f32 %v410, %v411
    %v413 = vrot.slane %v412, 2
    %v414 = vadd.f32 %v412, %v413
    %v415 = vrot.slane %v414, 1
    %v416 = vadd.f32 %v414, %v415
    %v417 = vmul.f32 %v38, %v416
    %v418 = vrcp.pop %v407
    %v419 = vmul.f32 %v417, %v418
    %v420 = vadd.f32 %v378, %v419
    %v421 = vlaneseq
    %v422 = vshrl.u32 %v421, 7
    %v423 = vsub.s32 1, %v422
    %v424 = vrot.slane %v380, %v423
    %v425 = vmul.f32 %v424, %v37
    %v426 = vmul.f32 %v424, %v38
    %v427 = vlaneseq
    %v428 = vshrl.u32 %v427, 7
    %v429 = vsub.s32 1, %v428
    %v430 = vrot.slane %v384, %v429
    %v431 = vsub.f32 %v425, %v430
    %v432 = vsub.f32 %v426, %v430
    %v433 = vmul.f32 %v431, 1.442695
    %v434 = vpow.pop %v433
    %v435 = vmul.f32 %v432, 1.442695
    %v436 = vpow.pop %v435
    %v437 = vadd.f32 %v434, %v436
    %v438 = vrot.slane %v437, 4
    %v439 = vadd.f32 %v437, %v438
    %v440 = vrot.slane %v439, 2
    %v441 = vadd.f32 %v439, %v440
    %v442 = vrot.slane %v441, 1
    %v443 = vadd.f32 %v441, %v442
    %v444 = vmul.f32 %v434, %v37
    %v445 = vmul.f32 %v436, %v38
    %v446 = vadd.f32 %v444, %v445
    %v447 = vrot.slane %v446, 4
    %v448 = vadd.f32 %v446, %v447
    %v449 = vrot.slane %v448, 2
    %v450 = vadd.f32 %v448, %v449
    %v451 = vrot.slane %v450, 1
    %v452 = vadd.f32 %v450, %v451
    %v453 = vmul.f32 %v38, %v452
    %v454 = vrcp.pop %v443
    %v455 = vmul.f32 %v453, %v454
    %v457 = vrot.slane %v455, 1
    %v459 = vadd.f32 %v420, %v457
    %v460 = vlaneseq
    %v461 = vshrl.u32 %v460, 7
    %v462 = vsub.s32 2, %v461
    %v463 = vrot.slane %v380, %v462
    %v464 = vmul.f32 %v463, %v37
    %v465 = vmul.f32 %v463, %v38
    %v466 = vlaneseq
    %v467 = vshrl.u32 %v466, 7
    %v468 = vsub.s32 2, %v467
    %v469 = vrot.slane %v384, %v468
    %v470 = vsub.f32 %v464, %v469
    %v471 = vsub.f32 %v465, %v469
    %v472 = vmul.f32 %v470, 1.442695
    %v473 = vpow.pop %v472
    %v474 = vmul.f32 %v471, 1.442695
    %v475 = vpow.pop %v474
    %v476 = vadd.f32 %v473, %v475
    %v477 = vrot.slane %v476, 4
    %v478 = vadd.f32 %v476, %v477
    %v479 = vrot.slane %v478, 2
    %v480 = vadd.f32 %v478, %v479
    %v481 = vrot.slane %v480, 1
    %v482 = vadd.f32 %v480, %v481
    %v483 = vmul.f32 %v473, %v37
    %v484 = vmul.f32 %v475, %v38
    %v485 = vadd.f32 %v483, %v484
    %v486 = vrot.slane %v485, 4
    %v487 = vadd.f32 %v485, %v486
    %v488 = vrot.slane %v487, 2
    %v489 = vadd.f32 %v487, %v488
    %v490 = vrot.slane %v489, 1
    %v491 = vadd.f32 %v489, %v490
    %v492 = vmul.f32 %v38, %v491
    %v493 = vrcp.pop %v482
    %v494 = vmul.f32 %v492, %v493
    %v496 = vrot.slane %v494, 2
    %v498 = vadd.f32 %v459, %v496
    %v499 = vlaneseq
    %v500 = vshrl.u32 %v499, 7
    %v501 = vsub.s32 3, %v500
    %v502 = vrot.slane %v380, %v501
    %v503 = vmul.f32 %v502, %v37
    %v504 = vmul.f32 %v502, %v38
    %v505 = vlaneseq
    %v506 = vshrl.u32 %v505, 7
    %v507 = vsub.s32 3, %v506
    %v508 = vrot.slane %v384, %v507
    %v509 = vsub.f32 %v503, %v508
    %v510 = vsub.f32 %v504, %v508
    %v511 = vmul.f32 %v509, 1.442695
    %v512 = vpow.pop %v511
    %v513 = vmul.f32 %v510, 1.442695
    %v514 = vpow.pop %v513
    %v515 = vadd.f32 %v512, %v514
    %v516 = vrot.slane %v515, 4
    %v517 = vadd.f32 %v515, %v516
    %v518 = vrot.slane %v517, 2
    %v519 = vadd.f32 %v517, %v518
    %v520 = vrot.slane %v519, 1
    %v521 = vadd.f32 %v519, %v520
    %v522 = vmul.f32 %v512, %v37
    %v523 = vmul.f32 %v514, %v38
    %v524 = vadd.f32 %v522, %v523
    %v525 = vrot.slane %v524, 4
    %v526 = vadd.f32 %v524, %v525
    %v527 = vrot.slane %v526, 2
    %v528 = vadd.f32 %v526, %v527
    %v529 = vrot.slane %v528, 1
    %v530 = vadd.f32 %v528, %v529
    %v531 = vmul.f32 %v38, %v530
    %v532 = vrcp.pop %v521
    %v533 = vmul.f32 %v531, %v532
    %v535 = vrot.slane %v533, 3
    %v537 = vadd.f32 %v498, %v535
    %v538 = vlaneseq
    %v539 = vshrl.u32 %v538, 7
    %v540 = vsub.s32 4, %v539
    %v541 = vrot.slane %v380, %v540
    %v542 = vmul.f32 %v541, %v37
    %v543 = vmul.f32 %v541, %v38
    %v544 = vlaneseq
    %v545 = vshrl.u32 %v544, 7
    %v546 = vsub.s32 4, %v545
    %v547 = vrot.slane %v384, %v546
    %v548 = vsub.f32 %v542, %v547
    %v549 = vsub.f32 %v543, %v547
    %v550 = vmul.f32 %v548, 1.442695
    %v551 = vpow.pop %v550
    %v552 = vmul.f32 %v549, 1.442695
    %v553 = vpow.pop %v552
    %v554 = vadd.f32 %v551, %v553
    %v555 = vrot.slane %v554, 4
    %v556 = vadd.f32 %v554, %v555
    %v557 = vrot.slane %v556, 2
    %v558 = vadd.f32 %v556, %v557
    %v559 = vrot.slane %v558, 1
    %v560 = vadd.f32 %v558, %v559
    %v561 = vmul.f32 %v551, %v37
    %v562 = vmul.f32 %v553, %v38
    %v563 = vadd.f32 %v561, %v562
    %v564 = vrot.slane %v563, 4
    %v565 = vadd.f32 %v563, %v564
    %v566 = vrot.slane %v565, 2
    %v567 = vadd.f32 %v565, %v566
    %v568 = vrot.slane %v567, 1
    %v569 = vadd.f32 %v567, %v568
    %v570 = vmul.f32 %v38, %v569
    %v571 = vrcp.pop %v560
    %v572 = vmul.f32 %v570, %v571
    %v574 = vrot.slane %v572, 4
    %v576 = vadd.f32 %v537, %v574
    %v577 = vlaneseq
    %v578 = vshrl.u32 %v577, 7
    %v579 = vsub.s32 5, %v578
    %v580 = vrot.slane %v380, %v579
    %v581 = vmul.f32 %v580, %v37
    %v582 = vmul.f32 %v580, %v38
    %v583 = vlaneseq
    %v584 = vshrl.u32 %v583, 7
    %v585 = vsub.s32 5, %v584
    %v586 = vrot.slane %v384, %v585
    %v587 = vsub.f32 %v581, %v586
    %v588 = vsub.f32 %v582, %v586
    %v589 = vmul.f32 %v587, 1.442695
    %v590 = vpow.pop %v589
    %v591 = vmul.f32 %v588, 1.442695
    %v592 = vpow.pop %v591
    %v593 = vadd.f32 %v590, %v592
    %v594 = vrot.slane %v593, 4
    %v595 = vadd.f32 %v593, %v594
    %v596 = vrot.slane %v595, 2
    %v597 = vadd.f32 %v595, %v596
    %v598 = vrot.slane %v597, 1
    %v599 = vadd.f32 %v597, %v598
    %v600 = vmul.f32 %v590, %v37
    %v601 = vmul.f32 %v592, %v38
    %v602 = vadd.f32 %v600, %v601
    %v603 = vrot.slane %v602, 4
    %v604 = vadd.f32 %v602, %v603
    %v605 = vrot.slane %v604, 2
    %v606 = vadd.f32 %v604, %v605
    %v607 = vrot.slane %v606, 1
    %v608 = vadd.f32 %v606, %v607
    %v609 = vmul.f32 %v38, %v608
    %v610 = vrcp.pop %v599
    %v611 = vmul.f32 %v609, %v610
    %v613 = vrot.slane %v611, 5
    %v615 = vadd.f32 %v576, %v613
    %v616 = vlaneseq
    %v617 = vshrl.u32 %v616, 7
    %v618 = vsub.s32 6, %v617
    %v619 = vrot.slane %v380, %v618
    %v620 = vmul.f32 %v619, %v37
    %v621 = vmul.f32 %v619, %v38
    %v622 = vlaneseq
    %v623 = vshrl.u32 %v622, 7
    %v624 = vsub.s32 6, %v623
    %v625 = vrot.slane %v384, %v624
    %v626 = vsub.f32 %v620, %v625
    %v627 = vsub.f32 %v621, %v625
    %v628 = vmul.f32 %v626, 1.442695
    %v629 = vpow.pop %v628
    %v630 = vmul.f32 %v627, 1.442695
    %v631 = vpow.pop %v630
    %v632 = vadd.f32 %v629, %v631
    %v633 = vrot.slane %v632, 4
    %v634 = vadd.f32 %v632, %v633
    %v635 = vrot.slane %v634, 2
    %v636 = vadd.f32 %v634, %v635
    %v637 = vrot.slane %v636, 1
    %v638 = vadd.f32 %v636, %v637
    %v639 = vmul.f32 %v629, %v37
    %v640 = vmul.f32 %v631, %v38
    %v641 = vadd.f32 %v639, %v640
    %v642 = vrot.slane %v641, 4
    %v643 = vadd.f32 %v641, %v642
    %v644 = vrot.slane %v643, 2
    %v645 = vadd.f32 %v643, %v644
    %v646 = vrot.slane %v645, 1
    %v647 = vadd.f32 %v645, %v646
    %v648 = vmul.f32 %v38, %v647
    %v649 = vrcp.pop %v638
    %v650 = vmul.f32 %v648, %v649
    %v652 = vrot.slane %v650, 6
    %v654 = vadd.f32 %v615, %v652
    %v655 = vlaneseq
    %v656 = vshrl.u32 %v655, 7
    %v657 = vsub.s32 7, %v656
    %v658 = vrot.slane %v380, %v657
    %v659 = vmul.f32 %v658, %v37
    %v660 = vmul.f32 %v658, %v38
    %v661 = vlaneseq
    %v662 = vshrl.u32 %v661, 7
    %v663 = vsub.s32 7, %v662
    %v664 = vrot.slane %v384, %v663
    %v665 = vsub.f32 %v659, %v664
    %v666 = vsub.f32 %v660, %v664
    %v667 = vmul.f32 %v665, 1.442695
    %v668 = vpow.pop %v667
    %v669 = vmul.f32 %v666, 1.442695
    %v670 = vpow.pop %v669
    %v671 = vadd.f32 %v668, %v670
    %v672 = vrot.slane %v671, 4
    %v673 = vadd.f32 %v671, %v672
    %v674 = vrot.slane %v673, 2
    %v675 = vadd.f32 %v673, %v674
    %v676 = vrot.slane %v675, 1
    %v677 = vadd.f32 %v675, %v676
    %v678 = vmul.f32 %v668, %v37
    %v679 = vmul.f32 %v670, %v38
    %v680 = vadd.f32 %v678, %v679
    %v681 = vrot.slane %v680, 4
    %v682 = vadd.f32 %v680, %v681
    %v683 = vrot.slane %v682, 2
    %v684 = vadd.f32 %v682, %v683
    %v685 = vrot.slane %v684, 1
    %v686 = vadd.f32 %v684, %v685
    %v687 = vmul.f32 %v38, %v686
    %v688 = vrcp.pop %v677
    %v689 = vmul.f32 %v687, %v688
    %v691 = vrot.slane %v689, 7
    %v693 = vadd.f32 %v654, %v691
    %v694 = vld [vmem:[%s2] sm:$0xff]
    %v695 = vld [vmem:[%s2 + $0x8] sm:$0xff]
    %v696 = vld [vmem:[%s2 + $0x10] sm:$0xff]
    %v697 = vld [vmem:[%s2 + $0x18] sm:$0xff]
    %v698 = vld [vmem:[%s2 + $0x20] sm:$0xff]
    %v699 = vld [vmem:[%s2 + $0x28] sm:$0xff]
    %v700 = vld [vmem:[%s2 + $0x30] sm:$0xff]
    %v701 = vld [vmem:[%s2 + $0x38] sm:$0xff]
    %v702 = vld [vmem:[%s2 + $0x40] sm:$0xff]
    %v703 = vld [vmem:[%s2 + $0x48] sm:$0xff]
    %v704 = vld [vmem:[%s2 + $0x50] sm:$0xff]
    %v705 = vld [vmem:[%s2 + $0x58] sm:$0xff]
    %v706 = vld [vmem:[%s2 + $0x60] sm:$0xff]
    %v707 = vld [vmem:[%s2 + $0x68] sm:$0xff]
    %v708 = vld [vmem:[%s2 + $0x70] sm:$0xff]
    %v709 = vld [vmem:[%s2 + $0x78] sm:$0xff]
    %v710 = vld [vmem:[%s2 + $0x80] sm:$0xff]
    %v711 = vld [vmem:[%s2 + $0x88] sm:$0xff]
    %v712 = vld [vmem:[%s2 + $0x90] sm:$0xff]
    %v713 = vld [vmem:[%s2 + $0x98] sm:$0xff]
    %v714 = vld [vmem:[%s2 + $0xa0] sm:$0xff]
    %v715 = vld [vmem:[%s2 + $0xa8] sm:$0xff]
    %v716 = vld [vmem:[%s2 + $0xb0] sm:$0xff]
    %v717 = vld [vmem:[%s2 + $0xb8] sm:$0xff]
    %v718 = vld [vmem:[%s2 + $0xc0] sm:$0xff]
    %v719 = vld [vmem:[%s2 + $0xc8] sm:$0xff]
    %v720 = vld [vmem:[%s2 + $0xd0] sm:$0xff]
    %v721 = vld [vmem:[%s2 + $0xd8] sm:$0xff]
    %v722 = vld [vmem:[%s2 + $0xe0] sm:$0xff]
    %v723 = vld [vmem:[%s2 + $0xe8] sm:$0xff]
    %v724 = vld [vmem:[%s2 + $0xf0] sm:$0xff]
    %v725 = vld [vmem:[%s2 + $0xf8] sm:$0xff]
    %727 = vset.pattern.permute.xlu0 0
    %728 = vperm.xlu0 %727, %v694
    %v729 = vpop.permute.xlu0 %728
    %732 = vset.pattern.permute.xlu0 0
    %733 = vperm.xlu0 %732, %v695
    %v734 = vpop.permute.xlu0 %733
    %737 = vset.pattern.permute.xlu0 0
    %738 = vperm.xlu0 %737, %v696
    %v739 = vpop.permute.xlu0 %738
    %742 = vset.pattern.permute.xlu0 0
    %743 = vperm.xlu0 %742, %v697
    %v744 = vpop.permute.xlu0 %743
    %747 = vset.pattern.permute.xlu0 0
    %748 = vperm.xlu0 %747, %v698
    %v749 = vpop.permute.xlu0 %748
    %752 = vset.pattern.permute.xlu0 0
    %753 = vperm.xlu0 %752, %v699
    %v754 = vpop.permute.xlu0 %753
    %757 = vset.pattern.permute.xlu0 0
    %758 = vperm.xlu0 %757, %v700
    %v759 = vpop.permute.xlu0 %758
    %762 = vset.pattern.permute.xlu0 0
    %763 = vperm.xlu0 %762, %v701
    %v764 = vpop.permute.xlu0 %763
    %767 = vset.pattern.permute.xlu0 0
    %768 = vperm.xlu0 %767, %v702
    %v769 = vpop.permute.xlu0 %768
    %772 = vset.pattern.permute.xlu0 0
    %773 = vperm.xlu0 %772, %v703
    %v774 = vpop.permute.xlu0 %773
    %777 = vset.pattern.permute.xlu0 0
    %778 = vperm.xlu0 %777, %v704
    %v779 = vpop.permute.xlu0 %778
    %782 = vset.pattern.permute.xlu0 0
    %783 = vperm.xlu0 %782, %v705
    %v784 = vpop.permute.xlu0 %783
    %787 = vset.pattern.permute.xlu0 0
    %788 = vperm.xlu0 %787, %v706
    %v789 = vpop.permute.xlu0 %788
    %792 = vset.pattern.permute.xlu0 0
    %793 = vperm.xlu0 %792, %v707
    %v794 = vpop.permute.xlu0 %793
    %797 = vset.pattern.permute.xlu0 0
    %798 = vperm.xlu0 %797, %v708
    %v799 = vpop.permute.xlu0 %798
    %802 = vset.pattern.permute.xlu0 0
    %803 = vperm.xlu0 %802, %v709
    %v804 = vpop.permute.xlu0 %803
    %807 = vset.pattern.permute.xlu0 0
    %808 = vperm.xlu0 %807, %v710
    %v809 = vpop.permute.xlu0 %808
    %812 = vset.pattern.permute.xlu0 0
    %813 = vperm.xlu0 %812, %v711
    %v814 = vpop.permute.xlu0 %813
    %817 = vset.pattern.permute.xlu0 0
    %818 = vperm.xlu0 %817, %v712
    %v819 = vpop.permute.xlu0 %818
    %822 = vset.pattern.permute.xlu0 0
    %823 = vperm.xlu0 %822, %v713
    %v824 = vpop.permute.xlu0 %823
    %827 = vset.pattern.permute.xlu0 0
    %828 = vperm.xlu0 %827, %v714
    %v829 = vpop.permute.xlu0 %828
    %832 = vset.pattern.permute.xlu0 0
    %833 = vperm.xlu0 %832, %v715
    %v834 = vpop.permute.xlu0 %833
    %837 = vset.pattern.permute.xlu0 0
    %838 = vperm.xlu0 %837, %v716
    %v839 = vpop.permute.xlu0 %838
    %842 = vset.pattern.permute.xlu0 0
    %843 = vperm.xlu0 %842, %v717
    %v844 = vpop.permute.xlu0 %843
    %847 = vset.pattern.permute.xlu0 0
    %848 = vperm.xlu0 %847, %v718
    %v849 = vpop.permute.xlu0 %848
    %852 = vset.pattern.permute.xlu0 0
    %853 = vperm.xlu0 %852, %v719
    %v854 = vpop.permute.xlu0 %853
    %857 = vset.pattern.permute.xlu0 0
    %858 = vperm.xlu0 %857, %v720
    %v859 = vpop.permute.xlu0 %858
    %862 = vset.pattern.permute.xlu0 0
    %863 = vperm.xlu0 %862, %v721
    %v864 = vpop.permute.xlu0 %863
    %867 = vset.pattern.permute.xlu0 0
    %868 = vperm.xlu0 %867, %v722
    %v869 = vpop.permute.xlu0 %868
    %872 = vset.pattern.permute.xlu0 0
    %873 = vperm.xlu0 %872, %v723
    %v874 = vpop.permute.xlu0 %873
    %877 = vset.pattern.permute.xlu0 0
    %878 = vperm.xlu0 %877, %v724
    %v879 = vpop.permute.xlu0 %878
    %882 = vset.pattern.permute.xlu0 0
    %883 = vperm.xlu0 %882, %v725
    %v884 = vpop.permute.xlu0 %883
    %v886 = vlaneseq
    %v887 = vshrl.u32 %v886, 7
    %v888 = vsub.s32 0, %v887
    %v889 = vrot.slane %v693, %v888
    %v890 = vmul.f32 %v729, %v889
    %v891 = vmul.f32 %v734, %v889
    %v892 = vmul.f32 %v739, %v889
    %v893 = vmul.f32 %v744, %v889
    %v894 = vmul.f32 %v749, %v889
    %v895 = vmul.f32 %v754, %v889
    %v896 = vmul.f32 %v759, %v889
    %v897 = vmul.f32 %v764, %v889
    %v898 = vmul.f32 %v769, %v889
    %v899 = vmul.f32 %v774, %v889
    %v900 = vmul.f32 %v779, %v889
    %v901 = vmul.f32 %v784, %v889
    %v902 = vmul.f32 %v789, %v889
    %v903 = vmul.f32 %v794, %v889
    %v904 = vmul.f32 %v799, %v889
    %v905 = vmul.f32 %v804, %v889
    %v906 = vmul.f32 %v809, %v889
    %v907 = vmul.f32 %v814, %v889
    %v908 = vmul.f32 %v819, %v889
    %v909 = vmul.f32 %v824, %v889
    %v910 = vmul.f32 %v829, %v889
    %v911 = vmul.f32 %v834, %v889
    %v912 = vmul.f32 %v839, %v889
    %v913 = vmul.f32 %v844, %v889
    %v914 = vmul.f32 %v849, %v889
    %v915 = vmul.f32 %v854, %v889
    %v916 = vmul.f32 %v859, %v889
    %v917 = vmul.f32 %v864, %v889
    %v918 = vmul.f32 %v869, %v889
    %v919 = vmul.f32 %v874, %v889
    %v920 = vmul.f32 %v879, %v889
    %v921 = vmul.f32 %v884, %v889
    %v922 = vld [vmem:[%s3] sm:$0xff]
    %v923 = vld [vmem:[%s3 + $0x8] sm:$0xff]
    %v924 = vld [vmem:[%s3 + $0x10] sm:$0xff]
    %v925 = vld [vmem:[%s3 + $0x18] sm:$0xff]
    %v926 = vld [vmem:[%s3 + $0x20] sm:$0xff]
    %v927 = vld [vmem:[%s3 + $0x28] sm:$0xff]
    %v928 = vld [vmem:[%s3 + $0x30] sm:$0xff]
    %v929 = vld [vmem:[%s3 + $0x38] sm:$0xff]
    %v930 = vld [vmem:[%s3 + $0x40] sm:$0xff]
    %v931 = vld [vmem:[%s3 + $0x48] sm:$0xff]
    %v932 = vld [vmem:[%s3 + $0x50] sm:$0xff]
    %v933 = vld [vmem:[%s3 + $0x58] sm:$0xff]
    %v934 = vld [vmem:[%s3 + $0x60] sm:$0xff]
    %v935 = vld [vmem:[%s3 + $0x68] sm:$0xff]
    %v936 = vld [vmem:[%s3 + $0x70] sm:$0xff]
    %v937 = vld [vmem:[%s3 + $0x78] sm:$0xff]
    %v938 = vld [vmem:[%s3 + $0x80] sm:$0xff]
    %v939 = vld [vmem:[%s3 + $0x88] sm:$0xff]
    %v940 = vld [vmem:[%s3 + $0x90] sm:$0xff]
    %v941 = vld [vmem:[%s3 + $0x98] sm:$0xff]
    %v942 = vld [vmem:[%s3 + $0xa0] sm:$0xff]
    %v943 = vld [vmem:[%s3 + $0xa8] sm:$0xff]
    %v944 = vld [vmem:[%s3 + $0xb0] sm:$0xff]
    %v945 = vld [vmem:[%s3 + $0xb8] sm:$0xff]
    %v946 = vld [vmem:[%s3 + $0xc0] sm:$0xff]
    %v947 = vld [vmem:[%s3 + $0xc8] sm:$0xff]
    %v948 = vld [vmem:[%s3 + $0xd0] sm:$0xff]
    %v949 = vld [vmem:[%s3 + $0xd8] sm:$0xff]
    %v950 = vld [vmem:[%s3 + $0xe0] sm:$0xff]
    %v951 = vld [vmem:[%s3 + $0xe8] sm:$0xff]
    %v952 = vld [vmem:[%s3 + $0xf0] sm:$0xff]
    %v953 = vld [vmem:[%s3 + $0xf8] sm:$0xff]
    %955 = vset.pattern.permute.xlu0 0
    %956 = vperm.xlu0 %955, %v922
    %v957 = vpop.permute.xlu0 %956
    %960 = vset.pattern.permute.xlu0 0
    %961 = vperm.xlu0 %960, %v923
    %v962 = vpop.permute.xlu0 %961
    %965 = vset.pattern.permute.xlu0 0
    %966 = vperm.xlu0 %965, %v924
    %v967 = vpop.permute.xlu0 %966
    %970 = vset.pattern.permute.xlu0 0
    %971 = vperm.xlu0 %970, %v925
    %v972 = vpop.permute.xlu0 %971
    %975 = vset.pattern.permute.xlu0 0
    %976 = vperm.xlu0 %975, %v926
    %v977 = vpop.permute.xlu0 %976
    %980 = vset.pattern.permute.xlu0 0
    %981 = vperm.xlu0 %980, %v927
    %v982 = vpop.permute.xlu0 %981
    %985 = vset.pattern.permute.xlu0 0
    %986 = vperm.xlu0 %985, %v928
    %v987 = vpop.permute.xlu0 %986
    %990 = vset.pattern.permute.xlu0 0
    %991 = vperm.xlu0 %990, %v929
    %v992 = vpop.permute.xlu0 %991
    %995 = vset.pattern.permute.xlu0 0
    %996 = vperm.xlu0 %995, %v930
    %v997 = vpop.permute.xlu0 %996
    %1000 = vset.pattern.permute.xlu0 0
    %1001 = vperm.xlu0 %1000, %v931
    %v1002 = vpop.permute.xlu0 %1001
    %1005 = vset.pattern.permute.xlu0 0
    %1006 = vperm.xlu0 %1005, %v932
    %v1007 = vpop.permute.xlu0 %1006
    %1010 = vset.pattern.permute.xlu0 0
    %1011 = vperm.xlu0 %1010, %v933
    %v1012 = vpop.permute.xlu0 %1011
    %1015 = vset.pattern.permute.xlu0 0
    %1016 = vperm.xlu0 %1015, %v934
    %v1017 = vpop.permute.xlu0 %1016
    %1020 = vset.pattern.permute.xlu0 0
    %1021 = vperm.xlu0 %1020, %v935
    %v1022 = vpop.permute.xlu0 %1021
    %1025 = vset.pattern.permute.xlu0 0
    %1026 = vperm.xlu0 %1025, %v936
    %v1027 = vpop.permute.xlu0 %1026
    %1030 = vset.pattern.permute.xlu0 0
    %1031 = vperm.xlu0 %1030, %v937
    %v1032 = vpop.permute.xlu0 %1031
    %1035 = vset.pattern.permute.xlu0 0
    %1036 = vperm.xlu0 %1035, %v938
    %v1037 = vpop.permute.xlu0 %1036
    %1040 = vset.pattern.permute.xlu0 0
    %1041 = vperm.xlu0 %1040, %v939
    %v1042 = vpop.permute.xlu0 %1041
    %1045 = vset.pattern.permute.xlu0 0
    %1046 = vperm.xlu0 %1045, %v940
    %v1047 = vpop.permute.xlu0 %1046
    %1050 = vset.pattern.permute.xlu0 0
    %1051 = vperm.xlu0 %1050, %v941
    %v1052 = vpop.permute.xlu0 %1051
    %1055 = vset.pattern.permute.xlu0 0
    %1056 = vperm.xlu0 %1055, %v942
    %v1057 = vpop.permute.xlu0 %1056
    %1060 = vset.pattern.permute.xlu0 0
    %1061 = vperm.xlu0 %1060, %v943
    %v1062 = vpop.permute.xlu0 %1061
    %1065 = vset.pattern.permute.xlu0 0
    %1066 = vperm.xlu0 %1065, %v944
    %v1067 = vpop.permute.xlu0 %1066
    %1070 = vset.pattern.permute.xlu0 0
    %1071 = vperm.xlu0 %1070, %v945
    %v1072 = vpop.permute.xlu0 %1071
    %1075 = vset.pattern.permute.xlu0 0
    %1076 = vperm.xlu0 %1075, %v946
    %v1077 = vpop.permute.xlu0 %1076
    %1080 = vset.pattern.permute.xlu0 0
    %1081 = vperm.xlu0 %1080, %v947
    %v1082 = vpop.permute.xlu0 %1081
    %1085 = vset.pattern.permute.xlu0 0
    %1086 = vperm.xlu0 %1085, %v948
    %v1087 = vpop.permute.xlu0 %1086
    %1090 = vset.pattern.permute.xlu0 0
    %1091 = vperm.xlu0 %1090, %v949
    %v1092 = vpop.permute.xlu0 %1091
    %1095 = vset.pattern.permute.xlu0 0
    %1096 = vperm.xlu0 %1095, %v950
    %v1097 = vpop.permute.xlu0 %1096
    %1100 = vset.pattern.permute.xlu0 0
    %1101 = vperm.xlu0 %1100, %v951
    %v1102 = vpop.permute.xlu0 %1101
    %1105 = vset.pattern.permute.xlu0 0
    %1106 = vperm.xlu0 %1105, %v952
    %v1107 = vpop.permute.xlu0 %1106
    %1110 = vset.pattern.permute.xlu0 0
    %1111 = vperm.xlu0 %1110, %v953
    %v1112 = vpop.permute.xlu0 %1111
    %v1114 = vmul.f32 %v957, %v61
    %v1115 = vmul.f32 %v962, %v61
    %v1116 = vmul.f32 %v967, %v61
    %v1117 = vmul.f32 %v972, %v61
    %v1118 = vmul.f32 %v977, %v61
    %v1119 = vmul.f32 %v982, %v61
    %v1120 = vmul.f32 %v987, %v61
    %v1121 = vmul.f32 %v992, %v61
    %v1122 = vmul.f32 %v997, %v61
    %v1123 = vmul.f32 %v1002, %v61
    %v1124 = vmul.f32 %v1007, %v61
    %v1125 = vmul.f32 %v1012, %v61
    %v1126 = vmul.f32 %v1017, %v61
    %v1127 = vmul.f32 %v1022, %v61
    %v1128 = vmul.f32 %v1027, %v61
    %v1129 = vmul.f32 %v1032, %v61
    %v1130 = vmul.f32 %v1037, %v61
    %v1131 = vmul.f32 %v1042, %v61
    %v1132 = vmul.f32 %v1047, %v61
    %v1133 = vmul.f32 %v1052, %v61
    %v1134 = vmul.f32 %v1057, %v61
    %v1135 = vmul.f32 %v1062, %v61
    %v1136 = vmul.f32 %v1067, %v61
    %v1137 = vmul.f32 %v1072, %v61
    %v1138 = vmul.f32 %v1077, %v61
    %v1139 = vmul.f32 %v1082, %v61
    %v1140 = vmul.f32 %v1087, %v61
    %v1141 = vmul.f32 %v1092, %v61
    %v1142 = vmul.f32 %v1097, %v61
    %v1143 = vmul.f32 %v1102, %v61
    %v1144 = vmul.f32 %v1107, %v61
    %v1145 = vmul.f32 %v1112, %v61
    %v1146 = vadd.f32 %v890, %v1114
    %v1147 = vadd.f32 %v891, %v1115
    %v1148 = vadd.f32 %v892, %v1116
    %v1149 = vadd.f32 %v893, %v1117
    %v1150 = vadd.f32 %v894, %v1118
    %v1151 = vadd.f32 %v895, %v1119
    %v1152 = vadd.f32 %v896, %v1120
    %v1153 = vadd.f32 %v897, %v1121
    %v1154 = vadd.f32 %v898, %v1122
    %v1155 = vadd.f32 %v899, %v1123
    %v1156 = vadd.f32 %v900, %v1124
    %v1157 = vadd.f32 %v901, %v1125
    %v1158 = vadd.f32 %v902, %v1126
    %v1159 = vadd.f32 %v903, %v1127
    %v1160 = vadd.f32 %v904, %v1128
    %v1161 = vadd.f32 %v905, %v1129
    %v1162 = vadd.f32 %v906, %v1130
    %v1163 = vadd.f32 %v907, %v1131
    %v1164 = vadd.f32 %v908, %v1132
    %v1165 = vadd.f32 %v909, %v1133
    %v1166 = vadd.f32 %v910, %v1134
    %v1167 = vadd.f32 %v911, %v1135
    %v1168 = vadd.f32 %v912, %v1136
    %v1169 = vadd.f32 %v913, %v1137
    %v1170 = vadd.f32 %v914, %v1138
    %v1171 = vadd.f32 %v915, %v1139
    %v1172 = vadd.f32 %v916, %v1140
    %v1173 = vadd.f32 %v917, %v1141
    %v1174 = vadd.f32 %v918, %v1142
    %v1175 = vadd.f32 %v919, %v1143
    %v1176 = vadd.f32 %v920, %v1144
    %v1177 = vadd.f32 %v921, %v1145
    %v1178 = vmax.f32 %v1146, 0.0
    %v1179 = vmax.f32 %v1147, 0.0
    %v1180 = vmax.f32 %v1148, 0.0
    %v1181 = vmax.f32 %v1149, 0.0
    %v1182 = vmax.f32 %v1150, 0.0
    %v1183 = vmax.f32 %v1151, 0.0
    %v1184 = vmax.f32 %v1152, 0.0
    %v1185 = vmax.f32 %v1153, 0.0
    %v1186 = vmax.f32 %v1154, 0.0
    %v1187 = vmax.f32 %v1155, 0.0
    %v1188 = vmax.f32 %v1156, 0.0
    %v1189 = vmax.f32 %v1157, 0.0
    %v1190 = vmax.f32 %v1158, 0.0
    %v1191 = vmax.f32 %v1159, 0.0
    %v1192 = vmax.f32 %v1160, 0.0
    %v1193 = vmax.f32 %v1161, 0.0
    %v1194 = vmax.f32 %v1162, 0.0
    %v1195 = vmax.f32 %v1163, 0.0
    %v1196 = vmax.f32 %v1164, 0.0
    %v1197 = vmax.f32 %v1165, 0.0
    %v1198 = vmax.f32 %v1166, 0.0
    %v1199 = vmax.f32 %v1167, 0.0
    %v1200 = vmax.f32 %v1168, 0.0
    %v1201 = vmax.f32 %v1169, 0.0
    %v1202 = vmax.f32 %v1170, 0.0
    %v1203 = vmax.f32 %v1171, 0.0
    %v1204 = vmax.f32 %v1172, 0.0
    %v1205 = vmax.f32 %v1173, 0.0
    %v1206 = vmax.f32 %v1174, 0.0
    %v1207 = vmax.f32 %v1175, 0.0
    %v1208 = vmax.f32 %v1176, 0.0
    %v1209 = vmax.f32 %v1177, 0.0
    %v1210 = vrsqrt.pop %v1178
    %v1211 = vrsqrt.pop %v1179
    %v1212 = vrsqrt.pop %v1180
    %v1213 = vrsqrt.pop %v1181
    %v1214 = vrsqrt.pop %v1182
    %v1215 = vrsqrt.pop %v1183
    %v1216 = vrsqrt.pop %v1184
    %v1217 = vrsqrt.pop %v1185
    %v1218 = vrsqrt.pop %v1186
    %v1219 = vrsqrt.pop %v1187
    %v1220 = vrsqrt.pop %v1188
    %v1221 = vrsqrt.pop %v1189
    %v1222 = vrsqrt.pop %v1190
    %v1223 = vrsqrt.pop %v1191
    %v1224 = vrsqrt.pop %v1192
    %v1225 = vrsqrt.pop %v1193
    %v1226 = vrsqrt.pop %v1194
    %v1227 = vrsqrt.pop %v1195
    %v1228 = vrsqrt.pop %v1196
    %v1229 = vrsqrt.pop %v1197
    %v1230 = vrsqrt.pop %v1198
    %v1231 = vrsqrt.pop %v1199
    %v1232 = vrsqrt.pop %v1200
    %v1233 = vrsqrt.pop %v1201
    %v1234 = vrsqrt.pop %v1202
    %v1235 = vrsqrt.pop %v1203
    %v1236 = vrsqrt.pop %v1204
    %v1237 = vrsqrt.pop %v1205
    %v1238 = vrsqrt.pop %v1206
    %v1239 = vrsqrt.pop %v1207
    %v1240 = vrsqrt.pop %v1208
    %v1241 = vrsqrt.pop %v1209
    %1242 = vxpose.xlu0.b32.start [1/16] %v1210, 128
    %1243 = vxpose.xlu0.b32.cont [2/16] %v1211, 128
    %1244 = vxpose.xlu0.b32.cont [3/16] %v1212, 128
    %1245 = vxpose.xlu0.b32.cont [4/16] %v1213, 128
    %1246 = vxpose.xlu0.b32.cont [5/16] %v1214, 128
    %1247 = vxpose.xlu0.b32.cont [6/16] %v1215, 128
    %1248 = vxpose.xlu0.b32.cont [7/16] %v1216, 128
    %1249 = vxpose.xlu0.b32.cont [8/16] %v1217, 128
    %1250 = vxpose.xlu0.b32.cont [9/16] %v1218, 128
    %1251 = vxpose.xlu0.b32.cont [10/16] %v1219, 128
    %1252 = vxpose.xlu0.b32.cont [11/16] %v1220, 128
    %1253 = vxpose.xlu0.b32.cont [12/16] %v1221, 128
    %1254 = vxpose.xlu0.b32.cont [13/16] %v1222, 128
    %1255 = vxpose.xlu0.b32.cont [14/16] %v1223, 128
    %1256 = vxpose.xlu0.b32.cont [15/16] %v1224, 128
    %1257 = vxpose.xlu0.b32.end [16/16] %v1225, 128
    %v1258 = vpop.trf.xlu0
    %v1259 = vpop.trf.xlu0
    %v1260 = vpop.trf.xlu0
    %v1261 = vpop.trf.xlu0
    %v1262 = vpop.trf.xlu0
    %v1263 = vpop.trf.xlu0
    %v1264 = vpop.trf.xlu0
    %v1265 = vpop.trf.xlu0
    %v1266 = vpop.trf.xlu0
    %v1267 = vpop.trf.xlu0
    %v1268 = vpop.trf.xlu0
    %v1269 = vpop.trf.xlu0
    %v1270 = vpop.trf.xlu0
    %v1271 = vpop.trf.xlu0
    %v1272 = vpop.trf.xlu0
    %v1273 = vpop.trf.xlu0
    %1274 = vxpose.xlu0.b32.start [1/16] %v1226, 128
    %1275 = vxpose.xlu0.b32.cont [2/16] %v1227, 128
    %1276 = vxpose.xlu0.b32.cont [3/16] %v1228, 128
    %1277 = vxpose.xlu0.b32.cont [4/16] %v1229, 128
    %1278 = vxpose.xlu0.b32.cont [5/16] %v1230, 128
    %1279 = vxpose.xlu0.b32.cont [6/16] %v1231, 128
    %1280 = vxpose.xlu0.b32.cont [7/16] %v1232, 128
    %1281 = vxpose.xlu0.b32.cont [8/16] %v1233, 128
    %1282 = vxpose.xlu0.b32.cont [9/16] %v1234, 128
    %1283 = vxpose.xlu0.b32.cont [10/16] %v1235, 128
    %1284 = vxpose.xlu0.b32.cont [11/16] %v1236, 128
    %1285 = vxpose.xlu0.b32.cont [12/16] %v1237, 128
    %1286 = vxpose.xlu0.b32.cont [13/16] %v1238, 128
    %1287 = vxpose.xlu0.b32.cont [14/16] %v1239, 128
    %1288 = vxpose.xlu0.b32.cont [15/16] %v1240, 128
    %1289 = vxpose.xlu0.b32.end [16/16] %v1241, 128
    %v1290 = vpop.trf.xlu0
    %v1291 = vpop.trf.xlu0
    %v1292 = vpop.trf.xlu0
    %v1293 = vpop.trf.xlu0
    %v1294 = vpop.trf.xlu0
    %v1295 = vpop.trf.xlu0
    %v1296 = vpop.trf.xlu0
    %v1297 = vpop.trf.xlu0
    %v1298 = vpop.trf.xlu0
    %v1299 = vpop.trf.xlu0
    %v1300 = vpop.trf.xlu0
    %v1301 = vpop.trf.xlu0
    %v1302 = vpop.trf.xlu0
    %v1303 = vpop.trf.xlu0
    %v1304 = vpop.trf.xlu0
    %v1305 = vpop.trf.xlu0
    %v1306 = vpack.c.bf16 %v1259, %v1258
    %v1307 = vpack.c.bf16 %v1291, %v1290
    %v1308 = vpack.c.bf16 %v1261, %v1260
    %v1309 = vpack.c.bf16 %v1293, %v1292
    %v1310 = vpack.c.bf16 %v1263, %v1262
    %v1311 = vpack.c.bf16 %v1295, %v1294
    %v1312 = vpack.c.bf16 %v1265, %v1264
    %v1313 = vpack.c.bf16 %v1297, %v1296
    %v1314 = vpack.c.bf16 %v1267, %v1266
    %v1315 = vpack.c.bf16 %v1299, %v1298
    %v1316 = vpack.c.bf16 %v1269, %v1268
    %v1317 = vpack.c.bf16 %v1301, %v1300
    %v1318 = vpack.c.bf16 %v1271, %v1270
    %v1319 = vpack.c.bf16 %v1303, %v1302
    %v1320 = vpack.c.bf16 %v1273, %v1272
    %v1321 = vpack.c.bf16 %v1305, %v1304
    %v1322 = vld [vmem:[%s4] sm:$0xff]
    %v1323 = vld [vmem:[%s4 + $0x8] sm:$0xff]
    %v1324 = vld [vmem:[%s4 + $0x10] sm:$0xff]
    %v1325 = vld [vmem:[%s4 + $0x18] sm:$0xff]
    %v1326 = vld [vmem:[%s4 + $0x20] sm:$0xff]
    %v1327 = vld [vmem:[%s4 + $0x28] sm:$0xff]
    %v1328 = vld [vmem:[%s4 + $0x30] sm:$0xff]
    %v1329 = vld [vmem:[%s4 + $0x38] sm:$0xff]
    %v1330 = vld [vmem:[%s4 + $0x40] sm:$0xff]
    %v1331 = vld [vmem:[%s4 + $0x48] sm:$0xff]
    %v1332 = vld [vmem:[%s4 + $0x50] sm:$0xff]
    %v1333 = vld [vmem:[%s4 + $0x58] sm:$0xff]
    %v1334 = vld [vmem:[%s4 + $0x60] sm:$0xff]
    %v1335 = vld [vmem:[%s4 + $0x68] sm:$0xff]
    %v1336 = vld [vmem:[%s4 + $0x70] sm:$0xff]
    %v1337 = vld [vmem:[%s4 + $0x78] sm:$0xff]
    %v1338 = vld [vmem:[%s4 + $0x80] sm:$0xff]
    %v1339 = vld [vmem:[%s4 + $0x88] sm:$0xff]
    %v1340 = vld [vmem:[%s4 + $0x90] sm:$0xff]
    %v1341 = vld [vmem:[%s4 + $0x98] sm:$0xff]
    %v1342 = vld [vmem:[%s4 + $0xa0] sm:$0xff]
    %v1343 = vld [vmem:[%s4 + $0xa8] sm:$0xff]
    %v1344 = vld [vmem:[%s4 + $0xb0] sm:$0xff]
    %v1345 = vld [vmem:[%s4 + $0xb8] sm:$0xff]
    %v1346 = vld [vmem:[%s4 + $0xc0] sm:$0xff]
    %v1347 = vld [vmem:[%s4 + $0xc8] sm:$0xff]
    %v1348 = vld [vmem:[%s4 + $0xd0] sm:$0xff]
    %v1349 = vld [vmem:[%s4 + $0xd8] sm:$0xff]
    %v1350 = vld [vmem:[%s4 + $0xe0] sm:$0xff]
    %v1351 = vld [vmem:[%s4 + $0xe8] sm:$0xff]
    %v1352 = vld [vmem:[%s4 + $0xf0] sm:$0xff]
    %v1353 = vld [vmem:[%s4 + $0xf8] sm:$0xff]
    %v1354 = vld [vmem:[%s5] sm:$0x3]
    %v1356 = vlaneseq
    %v1357 = vshrl.u32 %v1356, 7
    %v1358 = vsub.s32 0, %v1357
    %v1359 = vrot.slane %v1354, %v1358
    %v1360 = vlaneseq
    %v1361 = vshrl.u32 %v1360, 7
    %v1362 = vsub.s32 1, %v1361
    %v1363 = vrot.slane %v1354, %v1362
    %v1398 = vunpack.c.l.b16 %v1322
    %v1399 = vunpack.c.h.b16 %v1322
    %v1400 = vunpack.c.l.b16 %v1323
    %v1401 = vunpack.c.h.b16 %v1323
    %v1402 = vunpack.c.l.b16 %v1324
    %v1403 = vunpack.c.h.b16 %v1324
    %v1404 = vunpack.c.l.b16 %v1325
    %v1405 = vunpack.c.h.b16 %v1325
    %v1406 = vunpack.c.l.b16 %v1326
    %v1407 = vunpack.c.h.b16 %v1326
    %v1408 = vunpack.c.l.b16 %v1327
    %v1409 = vunpack.c.h.b16 %v1327
    %v1410 = vunpack.c.l.b16 %v1328
    %v1411 = vunpack.c.h.b16 %v1328
    %v1412 = vunpack.c.l.b16 %v1329
    %v1413 = vunpack.c.h.b16 %v1329
    %v1414 = vunpack.c.l.b16 %v1330
    %v1415 = vunpack.c.h.b16 %v1330
    %v1416 = vunpack.c.l.b16 %v1331
    %v1417 = vunpack.c.h.b16 %v1331
    %v1418 = vunpack.c.l.b16 %v1332
    %v1419 = vunpack.c.h.b16 %v1332
    %v1420 = vunpack.c.l.b16 %v1333
    %v1421 = vunpack.c.h.b16 %v1333
    %v1422 = vunpack.c.l.b16 %v1334
    %v1423 = vunpack.c.h.b16 %v1334
    %v1424 = vunpack.c.l.b16 %v1335
    %v1425 = vunpack.c.h.b16 %v1335
    %v1426 = vunpack.c.l.b16 %v1336
    %v1427 = vunpack.c.h.b16 %v1336
    %v1428 = vunpack.c.l.b16 %v1337
    %v1429 = vunpack.c.h.b16 %v1337
    %v1430 = vunpack.c.l.b16 %v1338
    %v1431 = vunpack.c.h.b16 %v1338
    %v1432 = vunpack.c.l.b16 %v1339
    %v1433 = vunpack.c.h.b16 %v1339
    %v1434 = vunpack.c.l.b16 %v1340
    %v1435 = vunpack.c.h.b16 %v1340
    %v1436 = vunpack.c.l.b16 %v1341
    %v1437 = vunpack.c.h.b16 %v1341
    %v1438 = vunpack.c.l.b16 %v1342
    %v1439 = vunpack.c.h.b16 %v1342
    %v1440 = vunpack.c.l.b16 %v1343
    %v1441 = vunpack.c.h.b16 %v1343
    %v1442 = vunpack.c.l.b16 %v1344
    %v1443 = vunpack.c.h.b16 %v1344
    %v1444 = vunpack.c.l.b16 %v1345
    %v1445 = vunpack.c.h.b16 %v1345
    %v1446 = vunpack.c.l.b16 %v1346
    %v1447 = vunpack.c.h.b16 %v1346
    %v1448 = vunpack.c.l.b16 %v1347
    %v1449 = vunpack.c.h.b16 %v1347
    %v1450 = vunpack.c.l.b16 %v1348
    %v1451 = vunpack.c.h.b16 %v1348
    %v1452 = vunpack.c.l.b16 %v1349
    %v1453 = vunpack.c.h.b16 %v1349
    %v1454 = vunpack.c.l.b16 %v1350
    %v1455 = vunpack.c.h.b16 %v1350
    %v1456 = vunpack.c.l.b16 %v1351
    %v1457 = vunpack.c.h.b16 %v1351
    %v1458 = vunpack.c.l.b16 %v1352
    %v1459 = vunpack.c.h.b16 %v1352
    %v1460 = vunpack.c.l.b16 %v1353
    %v1461 = vunpack.c.h.b16 %v1353
    %v1462 = vpack.c.b16 %v1400, %v1398
    %v1463 = vpack.c.b16 %v1401, %v1399
    %v1464 = vpack.c.b16 %v1404, %v1402
    %v1465 = vpack.c.b16 %v1405, %v1403
    %v1466 = vpack.c.b16 %v1408, %v1406
    %v1467 = vpack.c.b16 %v1409, %v1407
    %v1468 = vpack.c.b16 %v1412, %v1410
    %v1469 = vpack.c.b16 %v1413, %v1411
    %v1470 = vpack.c.b16 %v1416, %v1414
    %v1471 = vpack.c.b16 %v1417, %v1415
    %v1472 = vpack.c.b16 %v1420, %v1418
    %v1473 = vpack.c.b16 %v1421, %v1419
    %v1474 = vpack.c.b16 %v1424, %v1422
    %v1475 = vpack.c.b16 %v1425, %v1423
    %v1476 = vpack.c.b16 %v1428, %v1426
    %v1477 = vpack.c.b16 %v1429, %v1427
    %v1478 = vpack.c.b16 %v1432, %v1430
    %v1479 = vpack.c.b16 %v1433, %v1431
    %v1480 = vpack.c.b16 %v1436, %v1434
    %v1481 = vpack.c.b16 %v1437, %v1435
    %v1482 = vpack.c.b16 %v1440, %v1438
    %v1483 = vpack.c.b16 %v1441, %v1439
    %v1484 = vpack.c.b16 %v1444, %v1442
    %v1485 = vpack.c.b16 %v1445, %v1443
    %v1486 = vpack.c.b16 %v1448, %v1446
    %v1487 = vpack.c.b16 %v1449, %v1447
    %v1488 = vpack.c.b16 %v1452, %v1450
    %v1489 = vpack.c.b16 %v1453, %v1451
    %v1490 = vpack.c.b16 %v1456, %v1454
    %v1491 = vpack.c.b16 %v1457, %v1455
    %v1492 = vpack.c.b16 %v1460, %v1458
    %v1493 = vpack.c.b16 %v1461, %v1459
    %1526 = vmatprep.subr.bf16.mxu0 %v1463
    %1527 = vmatpush1.bf16.msra.mxu0 %v1462
    %1528 = vmatprep.subr.bf16.mxu0 %v1465
    %1529 = vmatpush1.bf16.msra.mxu0 %v1464
    %1530 = vmatprep.subr.bf16.mxu0 %v1467
    %1531 = vmatpush1.bf16.msra.mxu0 %v1466
    %1532 = vmatprep.subr.bf16.mxu0 %v1469
    %1533 = vmatpush1.bf16.msra.mxu0 %v1468
    %1534 = vmatprep.subr.bf16.mxu0 %v1471
    %1535 = vmatpush1.bf16.msra.mxu0 %v1470
    %1536 = vmatprep.subr.bf16.mxu0 %v1473
    %1537 = vmatpush1.bf16.msra.mxu0 %v1472
    %1538 = vmatprep.subr.bf16.mxu0 %v1475
    %1539 = vmatpush1.bf16.msra.mxu0 %v1474
    %1540 = vmatprep.subr.bf16.mxu0 %v1477
    %1541 = vmatpush1.bf16.msra.mxu0 %v1476
    %1542 = vmatprep.subr.bf16.mxu0 %v1479
    %1543 = vmatpush1.bf16.msra.mxu0 %v1478
    %1544 = vmatprep.subr.bf16.mxu0 %v1481
    %1545 = vmatpush1.bf16.msra.mxu0 %v1480
    %1546 = vmatprep.subr.bf16.mxu0 %v1483
    %1547 = vmatpush1.bf16.msra.mxu0 %v1482
    %1548 = vmatprep.subr.bf16.mxu0 %v1485
    %1549 = vmatpush1.bf16.msra.mxu0 %v1484
    %1550 = vmatprep.subr.bf16.mxu0 %v1487
    %1551 = vmatpush1.bf16.msra.mxu0 %v1486
    %1552 = vmatprep.subr.bf16.mxu0 %v1489
    %1553 = vmatpush1.bf16.msra.mxu0 %v1488
    %1554 = vmatprep.subr.bf16.mxu0 %v1491
    %1555 = vmatpush1.bf16.msra.mxu0 %v1490
    %1556 = vmatprep.subr.bf16.mxu0 %v1493
    %1557 = vmatpush1.bf16.msra.mxu0 %v1492
    %1558 = vmatprep.mubr.bf16.mxu0 %v1307
    %1559 = vmatmul.mubr.bf16.gmra.mrb[0].mxu0 %v1306
    %v1560 = vpop.f32.mrb[0].mxu0
    %v1561 = vadd.f32 %v1359, %v1560
    %v1562 = vpop.f32.mrb[0].mxu0
    %v1563 = vadd.f32 %v1363, %v1562
    %v1564 = vpop.f32.mrb[0].mxu0
    %v1565 = vadd.f32 %v1359, %v1564
    %v1566 = vpop.f32.mrb[0].mxu0
    %v1567 = vadd.f32 %v1363, %v1566
    %1568 = vmatprep.mubr.bf16.mxu0 %v1309
    %1569 = vmatmul.mubr.bf16.gmra.mrb[0].mxu0 %v1308
    %v1570 = vpop.f32.mrb[0].mxu0
    %v1571 = vadd.f32 %v1359, %v1570
    %v1572 = vpop.f32.mrb[0].mxu0
    %v1573 = vadd.f32 %v1363, %v1572
    %v1574 = vpop.f32.mrb[0].mxu0
    %v1575 = vadd.f32 %v1359, %v1574
    %v1576 = vpop.f32.mrb[0].mxu0
    %v1577 = vadd.f32 %v1363, %v1576
    %1578 = vmatprep.mubr.bf16.mxu0 %v1311
    %1579 = vmatmul.mubr.bf16.gmra.mrb[0].mxu0 %v1310
    %v1580 = vpop.f32.mrb[0].mxu0
    %v1581 = vadd.f32 %v1359, %v1580
    %v1582 = vpop.f32.mrb[0].mxu0
    %v1583 = vadd.f32 %v1363, %v1582
    %v1584 = vpop.f32.mrb[0].mxu0
    %v1585 = vadd.f32 %v1359, %v1584
    %v1586 = vpop.f32.mrb[0].mxu0
    %v1587 = vadd.f32 %v1363, %v1586
    %1588 = vmatprep.mubr.bf16.mxu0 %v1313
    %1589 = vmatmul.mubr.bf16.gmra.mrb[0].mxu0 %v1312
    %v1590 = vpop.f32.mrb[0].mxu0
    %v1591 = vadd.f32 %v1359, %v1590
    %v1592 = vpop.f32.mrb[0].mxu0
    %v1593 = vadd.f32 %v1363, %v1592
    %v1594 = vpop.f32.mrb[0].mxu0
    %v1595 = vadd.f32 %v1359, %v1594
    %v1596 = vpop.f32.mrb[0].mxu0
    %v1597 = vadd.f32 %v1363, %v1596
    %1598 = vmatprep.mubr.bf16.mxu0 %v1315
    %1599 = vmatmul.mubr.bf16.gmra.mrb[0].mxu0 %v1314
    %v1600 = vpop.f32.mrb[0].mxu0
    %v1601 = vadd.f32 %v1359, %v1600
    %v1602 = vpop.f32.mrb[0].mxu0
    %v1603 = vadd.f32 %v1363, %v1602
    %v1604 = vpop.f32.mrb[0].mxu0
    %v1605 = vadd.f32 %v1359, %v1604
    %v1606 = vpop.f32.mrb[0].mxu0
    %v1607 = vadd.f32 %v1363, %v1606
    %1608 = vmatprep.mubr.bf16.mxu0 %v1317
    %1609 = vmatmul.mubr.bf16.gmra.mrb[0].mxu0 %v1316
    %v1610 = vpop.f32.mrb[0].mxu0
    %v1611 = vadd.f32 %v1359, %v1610
    %v1612 = vpop.f32.mrb[0].mxu0
    %v1613 = vadd.f32 %v1363, %v1612
    %v1614 = vpop.f32.mrb[0].mxu0
    %v1615 = vadd.f32 %v1359, %v1614
    %v1616 = vpop.f32.mrb[0].mxu0
    %v1617 = vadd.f32 %v1363, %v1616
    %1618 = vmatprep.mubr.bf16.mxu0 %v1319
    %1619 = vmatmul.mubr.bf16.gmra.mrb[0].mxu0 %v1318
    %v1620 = vpop.f32.mrb[0].mxu0
    %v1621 = vadd.f32 %v1359, %v1620
    %v1622 = vpop.f32.mrb[0].mxu0
    %v1623 = vadd.f32 %v1363, %v1622
    %v1624 = vpop.f32.mrb[0].mxu0
    %v1625 = vadd.f32 %v1359, %v1624
    %v1626 = vpop.f32.mrb[0].mxu0
    %v1627 = vadd.f32 %v1363, %v1626
    %1628 = vmatprep.mubr.bf16.mxu0 %v1321
    %1629 = vmatmul.mubr.bf16.gmra.mrb[0].mxu0 %v1320
    %v1630 = vpop.f32.mrb[0].mxu0
    %v1631 = vadd.f32 %v1359, %v1630
    %v1632 = vpop.f32.mrb[0].mxu0
    %v1633 = vadd.f32 %v1363, %v1632
    %v1634 = vpop.f32.mrb[0].mxu0
    %v1635 = vadd.f32 %v1359, %v1634
    %v1636 = vpop.f32.mrb[0].mxu0
    %v1637 = vadd.f32 %v1363, %v1636
    %1638 = vdwg.mxu0
    %1639 = vst [vmem:[#allocation5] sm:$0xff] %v1561
    %1640 = vst [vmem:[#allocation5 + $0x8] sm:$0xff] %v1563
    %1641 = vst [vmem:[#allocation5 + $0x10] sm:$0xff] %v1565
    %1642 = vst [vmem:[#allocation5 + $0x18] sm:$0xff] %v1567
    %1643 = vst [vmem:[#allocation5 + $0x20] sm:$0xff] %v1571
    %1644 = vst [vmem:[#allocation5 + $0x28] sm:$0xff] %v1573
    %1645 = vst [vmem:[#allocation5 + $0x30] sm:$0xff] %v1575
    %1646 = vst [vmem:[#allocation5 + $0x38] sm:$0xff] %v1577
    %1647 = vst [vmem:[#allocation5 + $0x40] sm:$0xff] %v1581
    %1648 = vst [vmem:[#allocation5 + $0x48] sm:$0xff] %v1583
    %1649 = vst [vmem:[#allocation5 + $0x50] sm:$0xff] %v1585
    %1650 = vst [vmem:[#allocation5 + $0x58] sm:$0xff] %v1587
    %1651 = vst [vmem:[#allocation5 + $0x60] sm:$0xff] %v1591
    %1652 = vst [vmem:[#allocation5 + $0x68] sm:$0xff] %v1593
    %1653 = vst [vmem:[#allocation5 + $0x70] sm:$0xff] %v1595
    %1654 = vst [vmem:[#allocation5 + $0x78] sm:$0xff] %v1597
    %1655 = vst [vmem:[#allocation5 + $0x80] sm:$0xff] %v1601
    %1656 = vst [vmem:[#allocation5 + $0x88] sm:$0xff] %v1603
    %1657 = vst [vmem:[#allocation5 + $0x90] sm:$0xff] %v1605
    %1658 = vst [vmem:[#allocation5 + $0x98] sm:$0xff] %v1607
    %1659 = vst [vmem:[#allocation5 + $0xa0] sm:$0xff] %v1611
    %1660 = vst [vmem:[#allocation5 + $0xa8] sm:$0xff] %v1613
    %1661 = vst [vmem:[#allocation5 + $0xb0] sm:$0xff] %v1615
    %1662 = vst [vmem:[#allocation5 + $0xb8] sm:$0xff] %v1617
    %1663 = vst [vmem:[#allocation5 + $0xc0] sm:$0xff] %v1621
    %1664 = vst [vmem:[#allocation5 + $0xc8] sm:$0xff] %v1623
    %1665 = vst [vmem:[#allocation5 + $0xd0] sm:$0xff] %v1625
    %1666 = vst [vmem:[#allocation5 + $0xd8] sm:$0xff] %v1627
    %1667 = vst [vmem:[#allocation5 + $0xe0] sm:$0xff] %v1631
    %1668 = vst [vmem:[#allocation5 + $0xe8] sm:$0xff] %v1633
    %1669 = vst [vmem:[#allocation5 + $0xf0] sm:$0xff] %v1635
    %1670 = vst [vmem:[#allocation5 + $0xf8] sm:$0xff] %v1637
    %p1671 = scmp.eq.s32.totalorder 0, 0
    // Predicated region
    $region30: #{tpu_custom_call.1} parent=1 // pred_check
      %p1672 = pneg %p1671
    $region31: #{tpu_custom_call.1} parent=1 // pred_check_branch
      %1674 = sbr.rel (%p1672) target = $region33
    $region32: #{tpu_custom_call.1} parent=1 // pred_region
      %v1675 = vld [vmem:[%s5] sm:$0x3]
      %v1676 = vlaneseq
      %vm1677 = vcmp.ge.s32.totalorder %v1676, 0
      %vm1678 = vcmp.lt.s32.totalorder %v1676, 256
      %vm1679 = vmand %vm1677, %vm1678
      %1680 = vst.msk [vmem:[#allocation5] ss:$8 sm:$0x3] %vm1679, %v1675
      %1681 = vst.msk [vmem:[#allocation5] ss:$8 sm:$0x0] %vm1679, %v1675
    $region33: #{tpu_custom_call.1} parent=1 // pred_fallthru
      _
    // Predicated region
    $region34: #{tpu_custom_call.1} parent=1 // pred_check
      _
    $region35: #{tpu_custom_call.1} parent=1 // pred_check_branch
      %1683 = sbr.rel (0) target = $region37
    $region36: #{tpu_custom_call.1} parent=1 // pred_region
      %s1685 = ssub.s32 4096, 4096
      %1686 = vsyncadd [#allocation3], %s1685
      %s1687 = sshll.u32 [#allocation5], 4
      %s1688 = int_to_ptr.vmem [resolvable:$true] %s1687
      %1693 = dma.vmem_to_hbm [thread:$0]  %s1688, 4096, %s6, [#allocation3], 256, 256, 16
    $region37: #{tpu_custom_call.1} parent=1 // pred_fallthru
      _
    // Predicated region
    $region38: #{tpu_custom_call.1} parent=1 // pred_check
      _
    $region39: #{tpu_custom_call.1} parent=1 // pred_check_branch
      %1695 = sbr.rel (0) target = $region41
    $region40: #{tpu_custom_call.1} parent=1 // pred_region
      %1696 = dma.done [#allocation3], 4096
    $region41: #{tpu_custom_call.1} parent=1 // pred_fallthru
      _
    %1697 = vsyncpa [#allocation3], 1
    %1698 = vsyncpa [#allocation4], 1

</llo_original>
